<compile_context>
chip_gen: v5e
topology: v5e:2x2
jax: 0.10.0
libtpu: 0.0.40
codegen_flags: <defaults>
</compile_context>

<pallas_src>
import jax
import jax.numpy as jnp
from jax.experimental import pallas as pl
from jax.experimental.pallas import tpu as pltpu


_VMEM_LIMIT_BYTES = 48 * 1024 * 1024    # > v5e's 16 MiB scoped default, < v7x's 64 MiB physical
_VMEM_BUDGET_BYTES = 24 * 1024 * 1024   # tile-sizing budget (leaves ~2x headroom under the limit)


# ----------------------------------------------------------------------------
# In-kernel helpers (traced inside kernel bodies, shared by all kernels)
# ----------------------------------------------------------------------------
def _g_tile_pixels(zcat, w1_flat, b1_flat, gwc, gbc):
    """Generator for one (batch-tile, hw-tile).

    zcat:    (tb, Kz)        f32
    w1_flat: (Kz, thw*g_ch)  bf16, columns pixel-major (p*g_ch + g)
    b1_flat: (1,  thw*g_ch)  f32
    gwc:     (g_ch, img_ch)  bf16
    gbc:     (1, img_ch)     f32
    returns fake pixels (tb*thw, img_ch) f32, rows ordered (batch, pixel).
    """
    tb = zcat.shape[0]
    g_ch = gwc.shape[0]
    thw = w1_flat.shape[1] // g_ch
    # ONE MXU matmul per hw-tile: M=tb, K=Kz, N=thw*g_ch (lane-dense, mult. of 256).
    h = jnp.dot(zcat.astype(jnp.bfloat16), w1_flat,
                preferred_element_type=jnp.float32)              # (tb, thw*g_ch)
    h = jnp.maximum(h + b1_flat, 0.0)                            # f32 epilogue
    # Bring g_ch onto the contraction axis for the per-pixel 1x1 output conv.
    hg = h.reshape(tb * thw, g_ch)                               # rows = (b, p)
    img = jnp.dot(hg.astype(jnp.bfloat16), gwc,
                  preferred_element_type=jnp.float32) + gbc      # (tb*thw, img_ch)
    return jnp.tanh(img)


def _d_conv_vpu(pix, dw1, db1):
    """D 1x1 conv + ReLU as img_ch channel-broadcast FMAs on the VPU.

    pix: (N, img_ch) f32; dw1: (img_ch, d_ch) f32; db1: (1, d_ch) f32.
    K = img_ch (=3) would waste the MXU, so keep this off the matrix unit.
    """
    img_ch = dw1.shape[0]
    h = pix[:, 0:1] * dw1[0:1, :]
    for c in range(1, img_ch):                  # static unroll over channels
        h = h + pix[:, c:c + 1] * dw1[c:c + 1, :]
    return jnp.maximum(h + db1, 0.0)


def _d_head_fused(hp, ey, wout, bout):
    """Fused linear head + class projection:
       hp @ w + b + sum(ey*hp)  ==  sum(hp * (w_row + ey), -1) + b."""
    return jnp.sum(hp * (wout + ey), axis=-1, keepdims=True) + bout


# ----------------------------------------------------------------------------
# Fused G + D kernel (hot path: fake and real streams share one grid loop)
# ----------------------------------------------------------------------------
def _gd_fused_kernel(zcat_ref, x_ref, gw1_ref, gb1_ref, gwc_ref, gbc_ref,
                     dw1_ref, db1_ref, eyf_ref, eyr_ref, wout_ref, bout_ref,
                     df_ref, dr_ref, accf_ref, accr_ref):
    t = pl.program_id(1)
    nt = pl.num_programs(1)

    @pl.when(t == 0)
    def _init():
        accf_ref[...] = jnp.zeros_like(accf_ref)
        accr_ref[...] = jnp.zeros_like(accr_ref)

    tb, thw, img_ch = x_ref.shape
    d_ch = dw1_ref.shape[1]
    dw1 = dw1_ref[...]
    db1 = db1_ref[...]

    # ---- G: fake pixels for this (batch, hw) tile; never leave VMEM --------
    fake = _g_tile_pixels(zcat_ref[...], gw1_ref[...], gb1_ref[...],
                          gwc_ref[...], gbc_ref[...])            # (tb*thw, img_ch)

    # ---- D conv (VPU) + global sum-pool reduction: fake stream -------------
    hf = _d_conv_vpu(fake, dw1, db1)                             # (tb*thw, d_ch)
    accf_ref[...] += hf.reshape(tb, thw, d_ch).sum(axis=1)       # leading split

    # ---- D conv (VPU) + global sum-pool reduction: real stream -------------
    real = x_ref[...].reshape(tb * thw, img_ch)                  # leading merge
    hr = _d_conv_vpu(real, dw1, db1)
    accr_ref[...] += hr.reshape(tb, thw, d_ch).sum(axis=1)

    # ---- finalize: fused linear head + class projection ---------------------
    @pl.when(t == nt - 1)
    def _finalize():
        df_ref[...] = _d_head_fused(accf_ref[...], eyf_ref[...], wout_ref[...],
                                    bout_ref[...]).astype(df_ref.dtype)
        dr_ref[...] = _d_head_fused(accr_ref[...], eyr_ref[...], wout_ref[...],
                                    bout_ref[...]).astype(dr_ref.dtype)


# ----------------------------------------------------------------------------
# Standalone G / D kernels (only used on the non-fused branches of forward)
# ----------------------------------------------------------------------------
def _g_kernel(zcat_ref, gw1_ref, gb1_ref, gwc_ref, gbc_ref, o_ref):
    tb, thw, img_ch = o_ref.shape
    fake = _g_tile_pixels(zcat_ref[...], gw1_ref[...], gb1_ref[...],
                          gwc_ref[...], gbc_ref[...])            # (tb*thw, img_ch)
    o_ref[...] = fake.reshape(tb, thw, img_ch).astype(o_ref.dtype)


def _d_kernel(x_ref, dw1_ref, db1_ref, ey_ref, wout_ref, bout_ref,
              o_ref, acc_ref):
    t = pl.program_id(1)
    nt = pl.num_programs(1)

    @pl.when(t == 0)
    def _init():
        acc_ref[...] = jnp.zeros_like(acc_ref)

    tb, thw, img_ch = x_ref.shape
    d_ch = dw1_ref.shape[1]
    h = _d_conv_vpu(x_ref[...].reshape(tb * thw, img_ch),
                    dw1_ref[...], db1_ref[...])
    acc_ref[...] += h.reshape(tb, thw, d_ch).sum(axis=1)

    @pl.when(t == nt - 1)
    def _fin():
        o_ref[...] = _d_head_fused(acc_ref[...], ey_ref[...], wout_ref[...],
                                   bout_ref[...]).astype(o_ref.dtype)


# ----------------------------------------------------------------------------
# Tile selection
# ----------------------------------------------------------------------------
def _pick_batch_tile(B, max_tb=256):
    """Largest multiple of 8 dividing B (<= max_tb); prefer >= 2 batch blocks
    so the 'parallel' axis can be split across v7x's two TensorCores."""
    if B % 8 != 0:
        return B                       # tiny/odd batch: one full-batch block
    cands = [t for t in range(8, min(B, max_tb) + 1, 8) if B % t == 0]
    best = cands[-1]
    two_block = [t for t in cands if B // t >= 2]
    if two_block:
        best = two_block[-1]
    return best


# ----------------------------------------------------------------------------
# Synthetic G_D module (parameters + forward)
# ----------------------------------------------------------------------------
class GDPallas:
    """Minimal BigGAN-like G_D wrapper.

    G: shared class embedding -> per-pixel linear(z ++ e) -> ReLU -> 1x1 conv -> tanh
    D: 1x1 conv -> ReLU -> global sum pool -> linear + class projection
    cvD is None; DiffAugment(policy=False) is identity.
    """

    def __init__(self, key, *, dim_z=16, n_classes=10, shared_dim=8,
                 g_ch=128, d_ch=128, img_ch=3, H=8, W=8, block_hw=None):
        self.dim_z, self.n_classes = dim_z, n_classes
        self.shared_dim, self.g_ch, self.d_ch = shared_dim, g_ch, d_ch
        self.img_ch, self.H, self.W = img_ch, H, W
        HW = H * W
        self.block_hw = block_hw
        if block_hw is not None:
            assert HW % block_hw == 0
            assert block_hw == HW or block_hw % 8 == 0

        Kz = dim_z + shared_dim
        ks = jax.random.split(key, 8)
        s = 0.1
        bf = jnp.bfloat16
        w1 = s * jax.random.normal(ks[1], (HW, Kz, g_ch), jnp.float32)
        b1 = s * jax.random.normal(ks[2], (HW, g_ch), jnp.float32)
        self.params = {
            # G.shared: class embedding table
            "G_shared": s * jax.random.normal(ks[0], (n_classes, shared_dim),
                                              jnp.float32),
            # G per-pixel linear weights, stored flat (Kz, HW*g_ch), columns
            # pixel-major so each hw-tile is one contiguous lane-dense block
            # feeding a single (tb,Kz)x(Kz,thw*g_ch) MXU matmul.  bf16 halves
            # the HBM/DMA bytes of the only large weight.
            "G_W1": jnp.transpose(w1, (1, 0, 2)).reshape(Kz, HW * g_ch).astype(bf),
            "G_b1": b1.reshape(1, HW * g_ch),
            # G 1x1 output conv: g_ch -> img_ch
            "G_Wc": (s * jax.random.normal(ks[3], (g_ch, img_ch),
                                           jnp.float32)).astype(bf),
            "G_bc": s * jax.random.normal(ks[4], (1, img_ch), jnp.float32),
            # D 1x1 conv: img_ch -> d_ch (VPU path, kept f32; it is tiny)
            "D_W1": s * jax.random.normal(ks[5], (img_ch, d_ch), jnp.float32),
            "D_b1": jnp.zeros((1, d_ch), jnp.float32),
            # D linear head (stored as a lane row) + projection embedding
            "D_wout": s * jax.random.normal(ks[6], (1, d_ch), jnp.float32),
            "D_bout": jnp.zeros((1, 1), jnp.float32),
            "D_embed": s * jax.random.normal(ks[7], (n_classes, d_ch),
                                             jnp.float32),
        }

    # ---- VMEM-driven hw-tile choice ----------------------------------------
    def _fused_vmem_bytes(self, tb, thw):
        Kz = self.dim_z + self.shared_dim
        g, d, ic = self.g_ch, self.d_ch, self.img_ch
        # double-buffered pipelined inputs that change with the hw-tile index
        weights = 2 * (Kz * thw * g * 2 + thw * g * 4 + tb * thw * ic * 4)
        # f32/bf16 in-kernel intermediates (h, hg, fake, hf, hr) + accumulators
        inter = tb * thw * (g * 4 + g * 2 + ic * 4 + 2 * d * 4) + 2 * tb * d * 4
        return weights + inter

    def _pick_block_hw(self, tb):
        HW = self.H * self.W
        if self.block_hw is not None:
            return self.block_hw
        cands = [d for d in range(HW, 0, -1)
                 if HW % d == 0 and (d == HW or d % 8 == 0)]
        for d in cands:                       # biggest tile under the budget
            if self._fused_vmem_bytes(tb, d) <= _VMEM_BUDGET_BYTES:
                return d
        return cands[-1]

    # ---- fused G + D (hot path) ---------------------------------------------
    def _gd_fused(self, zcat, x3, eyf, eyr):
        p = self.params
        B, Kz = zcat.shape
        HW, img_ch = self.H * self.W, self.img_ch
        g_ch, d_ch = self.g_ch, self.d_ch
        tb = _pick_batch_tile(B)
        thw = self._pick_block_hw(tb)
        grid = (B // tb, HW // thw)

        return pl.pallas_call(
            _gd_fused_kernel,
            out_shape=(jax.ShapeDtypeStruct((B, 1), jnp.float32),
                       jax.ShapeDtypeStruct((B, 1), jnp.float32)),
            grid_spec=pltpu.PrefetchScalarGridSpec(
                num_scalar_prefetch=0,
                grid=grid,
                in_specs=[
                    pl.BlockSpec((tb, Kz), lambda b, t: (b, 0)),              # zcat
                    pl.BlockSpec((tb, thw, img_ch), lambda b, t: (b, t, 0)),  # real x
                    pl.BlockSpec((Kz, thw * g_ch), lambda b, t: (0, t)),      # G_W1
                    pl.BlockSpec((1, thw * g_ch), lambda b, t: (0, t)),       # G_b1
                    pl.BlockSpec((g_ch, img_ch), lambda b, t: (0, 0)),        # G_Wc
                    pl.BlockSpec((1, img_ch), lambda b, t: (0, 0)),           # G_bc
                    pl.BlockSpec((img_ch, d_ch), lambda b, t: (0, 0)),        # D_W1
                    pl.BlockSpec((1, d_ch), lambda b, t: (0, 0)),             # D_b1
                    pl.BlockSpec((tb, d_ch), lambda b, t: (b, 0)),            # embed(gy)
                    pl.BlockSpec((tb, d_ch), lambda b, t: (b, 0)),            # embed(dy)
                    pl.BlockSpec((1, d_ch), lambda b, t: (0, 0)),             # D_wout
                    pl.BlockSpec((1, 1), lambda b, t: (0, 0)),                # D_bout
                ],
                out_specs=(pl.BlockSpec((tb, 1), lambda b, t: (b, 0)),
                           pl.BlockSpec((tb, 1), lambda b, t: (b, 0))),
                scratch_shapes=[pltpu.VMEM((tb, d_ch), jnp.float32),
                                pltpu.VMEM((tb, d_ch), jnp.float32)],
            ),
            compiler_params=pltpu.CompilerParams(
                dimension_semantics=("parallel", "arbitrary"),
                vmem_limit_bytes=_VMEM_LIMIT_BYTES),
        )(zcat, x3, p["G_W1"], p["G_b1"], p["G_Wc"], p["G_bc"],
          p["D_W1"], p["D_b1"], eyf, eyr, p["D_wout"], p["D_bout"])

    # ---- standalone G (x is None / return_G_z branches) ----------------------
    def _g(self, zcat):
        p = self.params
        B, Kz = zcat.shape
        HW, img_ch, g_ch = self.H * self.W, self.img_ch, self.g_ch
        tb = _pick_batch_tile(B)
        thw = self._pick_block_hw(tb)
        grid = (B // tb, HW // thw)
        return pl.pallas_call(
            _g_kernel,
            out_shape=jax.ShapeDtypeStruct((B, HW, img_ch), jnp.float32),
            grid_spec=pltpu.PrefetchScalarGridSpec(
                num_scalar_prefetch=0,
                grid=grid,
                in_specs=[
                    pl.BlockSpec((tb, Kz), lambda b, t: (b, 0)),
                    pl.BlockSpec((Kz, thw * g_ch), lambda b, t: (0, t)),
                    pl.BlockSpec((1, thw * g_ch), lambda b, t: (0, t)),
                    pl.BlockSpec((g_ch, img_ch), lambda b, t: (0, 0)),
                    pl.BlockSpec((1, img_ch), lambda b, t: (0, 0)),
                ],
                out_specs=pl.BlockSpec((tb, thw, img_ch),
                                       lambda b, t: (b, t, 0)),
            ),
            compiler_params=pltpu.CompilerParams(
                dimension_semantics=("parallel", "parallel"),
                vmem_limit_bytes=_VMEM_LIMIT_BYTES),
        )(zcat, p["G_W1"], p["G_b1"], p["G_Wc"], p["G_bc"])

    # ---- standalone D (z is None / x is None branches) -----------------------
    def _d(self, x3, ey):
        p = self.params
        Bd, HW, img_ch = x3.shape
        d_ch = self.d_ch
        tb = _pick_batch_tile(Bd)
        thw = self._pick_block_hw(tb)
        grid = (Bd // tb, HW // thw)
        return pl.pallas_call(
            _d_kernel,
            out_shape=jax.ShapeDtypeStruct((Bd, 1), jnp.float32),
            grid_spec=pltpu.PrefetchScalarGridSpec(
                num_scalar_prefetch=0,
                grid=grid,
                in_specs=[
                    pl.BlockSpec((tb, thw, img_ch), lambda b, t: (b, t, 0)),
                    pl.BlockSpec((img_ch, d_ch), lambda b, t: (0, 0)),
                    pl.BlockSpec((1, d_ch), lambda b, t: (0, 0)),
                    pl.BlockSpec((tb, d_ch), lambda b, t: (b, 0)),
                    pl.BlockSpec((1, d_ch), lambda b, t: (0, 0)),
                    pl.BlockSpec((1, 1), lambda b, t: (0, 0)),
                ],
                out_specs=pl.BlockSpec((tb, 1), lambda b, t: (b, 0)),
                scratch_shapes=[pltpu.VMEM((tb, d_ch), jnp.float32)],
            ),
            compiler_params=pltpu.CompilerParams(
                dimension_semantics=("parallel", "arbitrary"),
                vmem_limit_bytes=_VMEM_LIMIT_BYTES),
        )(x3, p["D_W1"], p["D_b1"], ey, p["D_wout"], p["D_bout"])

    # ---- layout glue ---------------------------------------------------------
    def _to_pixels(self, x_nchw):
        # One host-side transpose NCHW -> (B, HW, C).  TODO(synk): for large
        # images keep x as NCHW-flat (B, C, HW) and transpose tiles in-kernel
        # so the real-stream DMA is fully lane-dense.
        B = x_nchw.shape[0]
        return jnp.transpose(x_nchw, (0, 2, 3, 1)).reshape(
            B, self.H * self.W, self.img_ch)

    # ---- G_D.forward ---------------------------------------------------------
    def forward(self, z, gy, x=None, dy=None, train_G=False,
                return_G_z=False, policy=False, CR=False, CR_augment=None):
        # TODO(synk): DiffAugment with an active policy, the CR/CR_augment paths
        # and the auxiliary cvD head are not exercised here (policy=False,
        # CR=False, cvD=None) and are not implemented.
        p = self.params

        if z is not None:
            e = jnp.take(p["G_shared"], gy, axis=0)               # G.shared(gy)
            zcat = jnp.concatenate([z, e], axis=1)                # (B, dim_z+shared)

        if z is not None and x is not None:
            # Hot path: fully fused G + D; G_z never leaves VMEM, fake/real
            # streams share one grid loop -> equals torch.split(D(cat(G_z, x))).
            x3 = self._to_pixels(x)
            eyf = jnp.take(p["D_embed"], gy, axis=0)
            eyr = jnp.take(p["D_embed"], dy, axis=0)
            d_fake, d_real = self._gd_fused(zcat, x3, eyf, eyr)
            return d_fake, d_real

        if z is None:
            # D on real images only.
            ey = jnp.take(p["D_embed"], dy, axis=0)
            return self._d(self._to_pixels(x), ey)

        # x is None: D on generated images only (pixel-major, no HBM transpose).
        gz3 = self._g(zcat)                                       # (B, HW, C)
        ey = jnp.take(p["D_embed"], gy, axis=0)
        d_out = self._d(gz3, ey)
        if return_G_z:
            B = z.shape[0]
            G_z = jnp.transpose(
                gz3.reshape(B, self.H, self.W, self.img_ch), (0, 3, 1, 2))
            return d_out, G_z                                     # NCHW boundary
        return d_out


# ----------------------------------------------------------------------------
# Pure-JAX reference of the exercised path (f32) for a sanity check
# ----------------------------------------------------------------------------
def _reference_forward(model, z, gy, x, dy):
    p = model.params
    B = z.shape[0]
    HW = model.H * model.W
    e = jnp.take(p["G_shared"], gy, axis=0)
    zcat = jnp.concatenate([z, e], axis=1)
    Kz = zcat.shape[1]
    w1 = p["G_W1"].astype(jnp.float32).reshape(Kz, HW, model.g_ch)
    b1 = p["G_b1"].reshape(HW, model.g_ch)
    h = jnp.maximum(jnp.einsum("bk,kpc->bpc", zcat, w1) + b1, 0.0)
    gz = jnp.tanh(jnp.einsum("bpc,cj->bpj", h, p["G_Wc"].astype(jnp.float32))
                  + p["G_bc"])
    x3 = jnp.transpose(x, (0, 2, 3, 1)).reshape(B, HW, model.img_ch)
    pix = jnp.concatenate([gz, x3], axis=0)
    y = jnp.concatenate([gy, dy], axis=0)
    hd = jnp.maximum(jnp.einsum("bpj,jd->bpd", pix, p["D_W1"]) + p["D_b1"], 0.0)
    hp = hd.sum(axis=1)
    ey = jnp.take(p["D_embed"], y, axis=0)
    out = hp @ p["D_wout"].T + p["D_bout"] + jnp.sum(ey * hp, axis=-1,
                                                     keepdims=True)
    return out[:B], out[B:]


# ----------------------------------------------------------------------------
if __name__ == "__main__":
    key = jax.random.PRNGKey(0)
    k_mod, k_z, k_x, k_gy, k_dy = jax.random.split(key, 5)

    B, dim_z, n_classes, H, W = 2, 16, 10, 8, 8
    model = GDPallas(k_mod, dim_z=dim_z, n_classes=n_classes, H=H, W=W)

    z = jax.random.normal(k_z, (B, dim_z), jnp.float32)
    gy = jax.random.randint(k_gy, (B,), 0, n_classes)
    x = jax.random.normal(k_x, (B, 3, H, W), jnp.float32)   # real images, NCHW
    dy = jax.random.randint(k_dy, (B,), 0, n_classes)

    ref_f, ref_r = _reference_forward(model, z, gy, x, dy)

    # Hot path, auto tiling (hw tile -> full HW): one fused pallas_call.
    d_fake, d_real = model.forward(z, gy, x=x, dy=dy)
    jax.block_until_ready((d_fake, d_real))
    assert d_fake.shape == (B, 1) and d_real.shape == (B, 1)
    assert bool(jnp.all(jnp.isfinite(d_fake))) and bool(jnp.all(jnp.isfinite(d_real)))
    assert bool(jnp.allclose(d_fake, ref_f, rtol=5e-2, atol=5e-2))
    assert bool(jnp.allclose(d_real, ref_r, rtol=5e-2, atol=5e-2))

    # Hot path again with a smaller hw tile to exercise the multi-step
    # accumulate / pl.when finalize reduction over the pixel axis.
    model.block_hw = 16
    d_fake2, d_real2 = model.forward(z, gy, x=x, dy=dy)
    jax.block_until_ready((d_fake2, d_real2))
    assert bool(jnp.allclose(d_fake2, ref_f, rtol=5e-2, atol=5e-2))
    assert bool(jnp.allclose(d_real2, ref_r, rtol=5e-2, atol=5e-2))
    model.block_hw = None

    # Non-fused branches: D on generated images only (x=None, return_G_z) and
    # D on real images only (z=None).
    d_gen, G_z = model.forward(z, gy, x=None, dy=None, return_G_z=True)
    jax.block_until_ready((d_gen, G_z))
    assert G_z.shape == (B, 3, H, W)
    assert bool(jnp.allclose(d_gen, ref_f, rtol=5e-2, atol=5e-2))

    d_real_only = model.forward(None, None, x=x, dy=dy)
    jax.block_until_ready(d_real_only)
    assert bool(jnp.allclose(d_real_only, ref_r, rtol=5e-2, atol=5e-2))

    print("KERNEL_OK")
</pallas_src>

<mosaic_0001>
module attributes {stable_mosaic.version = 11 : i64} {
  func.func @_gd_fused_kernel(%arg0: i32, %arg1: i32, %arg2: memref<2x24xf32, #tpu.memory_space<vmem>>, %arg3: memref<2x64x3xf32, #tpu.memory_space<vmem>>, %arg4: memref<24x8192xbf16, #tpu.memory_space<vmem>>, %arg5: memref<1x8192xf32, #tpu.memory_space<vmem>>, %arg6: memref<128x3xbf16, #tpu.memory_space<vmem>>, %arg7: memref<1x3xf32, #tpu.memory_space<vmem>>, %arg8: memref<3x128xf32, #tpu.memory_space<vmem>>, %arg9: memref<1x128xf32, #tpu.memory_space<vmem>>, %arg10: memref<2x128xf32, #tpu.memory_space<vmem>>, %arg11: memref<2x128xf32, #tpu.memory_space<vmem>>, %arg12: memref<1x128xf32, #tpu.memory_space<vmem>>, %arg13: memref<1x1xf32, #tpu.memory_space<vmem>>, %arg14: memref<2x1xf32, #tpu.memory_space<vmem>>, %arg15: memref<2x1xf32, #tpu.memory_space<vmem>>, %arg16: memref<2x128xf32, #tpu.memory_space<vmem>>, %arg17: memref<2x128xf32, #tpu.memory_space<vmem>>) attributes {dimension_semantics = [#tpu.dimension_semantics<parallel>, #tpu.dimension_semantics<arbitrary>], iteration_bounds = array<i64: 1, 1>, scalar_prefetch = 0 : i64, scratch_operands = 2 : i64, tpu.core_type = #tpu.core_type<tc>, window_params = [{transform_indices = @transform_0, window_bounds = array<i64: 2, 24>}, {transform_indices = @transform_1, window_bounds = array<i64: 2, 64, 3>}, {transform_indices = @transform_2, window_bounds = array<i64: 24, 8192>}, {transform_indices = @transform_3, window_bounds = array<i64: 1, 8192>}, {pipeline_mode = #tpu.pipeline_mode<synchronous>, transform_indices = @transform_4, window_bounds = array<i64: 128, 3>}, {pipeline_mode = #tpu.pipeline_mode<synchronous>, transform_indices = @transform_5, window_bounds = array<i64: 1, 3>}, {pipeline_mode = #tpu.pipeline_mode<synchronous>, transform_indices = @transform_6, window_bounds = array<i64: 3, 128>}, {pipeline_mode = #tpu.pipeline_mode<synchronous>, transform_indices = @transform_7, window_bounds = array<i64: 1, 128>}, {transform_indices = @transform_8, window_bounds = array<i64: 2, 128>}, {transform_indices = @transform_9, window_bounds = array<i64: 2, 128>}, {pipeline_mode = #tpu.pipeline_mode<synchronous>, transform_indices = @transform_10, window_bounds = array<i64: 1, 128>}, {pipeline_mode = #tpu.pipeline_mode<synchronous>, transform_indices = @transform_11, window_bounds = array<i64: 1, 1>}, {transform_indices = @transform_12, window_bounds = array<i64: 2, 1>}, {transform_indices = @transform_13, window_bounds = array<i64: 2, 1>}]} {
    %c0_i32 = arith.constant 0 : i32
    %0 = arith.cmpi eq, %arg1, %c0_i32 : i32
    %1 = arith.extui %0 : i1 to i32
    %c0_i32_0 = arith.constant 0 : i32
    %2 = arith.cmpi ne, %1, %c0_i32_0 : i32
    scf.if %2 {
      %cst_33 = arith.constant 0.000000e+00 : f32
      %79 = vector.broadcast %cst_33 : f32 to vector<2x128xf32>
      %c0_34 = arith.constant 0 : index
      %c0_35 = arith.constant 0 : index
      %80 = vector.load %arg16[%c0_34, %c0_35] : memref<2x128xf32, #tpu.memory_space<vmem>>, vector<2x128xf32>
      tpu.vector_store %arg16[%c0_34, %c0_35], %79 {strides = array<i32>} : memref<2x128xf32, #tpu.memory_space<vmem>>, vector<2x128xf32>,
      %cst_36 = arith.constant 0.000000e+00 : f32
      %81 = vector.broadcast %cst_36 : f32 to vector<2x128xf32>
      %c0_37 = arith.constant 0 : index
      %c0_38 = arith.constant 0 : index
      %82 = vector.load %arg17[%c0_37, %c0_38] : memref<2x128xf32, #tpu.memory_space<vmem>>, vector<2x128xf32>
      tpu.vector_store %arg17[%c0_37, %c0_38], %81 {strides = array<i32>} : memref<2x128xf32, #tpu.memory_space<vmem>>, vector<2x128xf32>,
    } else {
    }
    %c0 = arith.constant 0 : index
    %c0_1 = arith.constant 0 : index
    %3 = vector.load %arg8[%c0, %c0_1] : memref<3x128xf32, #tpu.memory_space<vmem>>, vector<3x128xf32>
    %c0_2 = arith.constant 0 : index
    %c0_3 = arith.constant 0 : index
    %4 = vector.load %arg9[%c0_2, %c0_3] : memref<1x128xf32, #tpu.memory_space<vmem>>, vector<1x128xf32>
    %c0_4 = arith.constant 0 : index
    %c0_5 = arith.constant 0 : index
    %5 = vector.load %arg2[%c0_4, %c0_5] : memref<2x24xf32, #tpu.memory_space<vmem>>, vector<2x24xf32>
    %c0_6 = arith.constant 0 : index
    %c0_7 = arith.constant 0 : index
    %6 = vector.load %arg4[%c0_6, %c0_7] : memref<24x8192xbf16, #tpu.memory_space<vmem>>, vector<24x8192xbf16>
    %c0_8 = arith.constant 0 : index
    %c0_9 = arith.constant 0 : index
    %7 = vector.load %arg5[%c0_8, %c0_9] : memref<1x8192xf32, #tpu.memory_space<vmem>>, vector<1x8192xf32>
    %c0_10 = arith.constant 0 : index
    %c0_11 = arith.constant 0 : index
    %8 = vector.load %arg6[%c0_10, %c0_11] : memref<128x3xbf16, #tpu.memory_space<vmem>>, vector<128x3xbf16>
    %c0_12 = arith.constant 0 : index
    %c0_13 = arith.constant 0 : index
    %9 = vector.load %arg7[%c0_12, %c0_13] : memref<1x3xf32, #tpu.memory_space<vmem>>, vector<1x3xf32>
    %10 = arith.truncf %5 : vector<2x24xf32> to vector<2x24xbf16>
    %cst = arith.constant dense<0.000000e+00> : vector<2x8192xf32>
    %11 = tpu.matmul %10, %6, %cst {dimension_numbers = #tpu.dot_dimension_numbers<[1], [0], [0], [1], [0, 0, 1, 1], [], []>} : vector<2x24xbf16>, vector<24x8192xbf16>, vector<2x8192xf32> -> vector<2x8192xf32>
    %12 = vector.broadcast %7 : vector<1x8192xf32> to vector<2x8192xf32>
    %13 = arith.addf %11, %12 : vector<2x8192xf32>
    %cst_14 = arith.constant 0.000000e+00 : f32
    %14 = vector.broadcast %cst_14 : f32 to vector<2x8192xf32>
    %15 = arith.maximumf %13, %14 : vector<2x8192xf32>
    %16 = vector.shape_cast %15 : vector<2x8192xf32> to vector<128x128xf32>
    %17 = arith.truncf %16 : vector<128x128xf32> to vector<128x128xbf16>
    %cst_15 = arith.constant dense<0.000000e+00> : vector<128x3xf32>
    %18 = tpu.matmul %17, %8, %cst_15 {dimension_numbers = #tpu.dot_dimension_numbers<[1], [0], [0], [1], [0, 0, 1, 1], [], []>} : vector<128x128xbf16>, vector<128x3xbf16>, vector<128x3xf32> -> vector<128x3xf32>
    %19 = vector.broadcast %9 : vector<1x3xf32> to vector<128x3xf32>
    %20 = arith.addf %18, %19 : vector<128x3xf32>
    %21 = math.tanh %20 : vector<128x3xf32>
    %22 = vector.extract_strided_slice %21 {offsets = [0, 0], sizes = [128, 1], strides = [1, 1]} : vector<128x3xf32> to vector<128x1xf32>
    %23 = vector.extract_strided_slice %3 {offsets = [0, 0], sizes = [1, 128], strides = [1, 1]} : vector<3x128xf32> to vector<1x128xf32>
    %24 = vector.broadcast %22 : vector<128x1xf32> to vector<128x128xf32>
    %25 = vector.broadcast %23 : vector<1x128xf32> to vector<128x128xf32>
    %26 = arith.mulf %24, %25 : vector<128x128xf32>
    %27 = vector.extract_strided_slice %21 {offsets = [0, 1], sizes = [128, 1], strides = [1, 1]} : vector<128x3xf32> to vector<128x1xf32>
    %28 = vector.extract_strided_slice %3 {offsets = [1, 0], sizes = [1, 128], strides = [1, 1]} : vector<3x128xf32> to vector<1x128xf32>
    %29 = vector.broadcast %27 : vector<128x1xf32> to vector<128x128xf32>
    %30 = vector.broadcast %28 : vector<1x128xf32> to vector<128x128xf32>
    %31 = arith.mulf %29, %30 : vector<128x128xf32>
    %32 = arith.addf %26, %31 : vector<128x128xf32>
    %33 = vector.extract_strided_slice %21 {offsets = [0, 2], sizes = [128, 1], strides = [1, 1]} : vector<128x3xf32> to vector<128x1xf32>
    %34 = vector.extract_strided_slice %3 {offsets = [2, 0], sizes = [1, 128], strides = [1, 1]} : vector<3x128xf32> to vector<1x128xf32>
    %35 = vector.broadcast %33 : vector<128x1xf32> to vector<128x128xf32>
    %36 = vector.broadcast %34 : vector<1x128xf32> to vector<128x128xf32>
    %37 = arith.mulf %35, %36 : vector<128x128xf32>
    %38 = arith.addf %32, %37 : vector<128x128xf32>
    %39 = vector.broadcast %4 : vector<1x128xf32> to vector<128x128xf32>
    %40 = arith.addf %38, %39 : vector<128x128xf32>
    %cst_16 = arith.constant 0.000000e+00 : f32
    %41 = vector.broadcast %cst_16 : f32 to vector<128x128xf32>
    %42 = arith.maximumf %40, %41 : vector<128x128xf32>
    %c0_17 = arith.constant 0 : index
    %c0_18 = arith.constant 0 : index
    %43 = vector.load %arg16[%c0_17, %c0_18] : memref<2x128xf32, #tpu.memory_space<vmem>>, vector<2x128xf32>
    %44 = vector.shape_cast %42 : vector<128x128xf32> to vector<2x64x128xf32>
    %cst_19 = arith.constant dense<0.000000e+00> : vector<2x128xf32>
    %45 = vector.multi_reduction <add>, %44, %cst_19 [1] : vector<2x64x128xf32> to vector<2x128xf32>
    %46 = arith.addf %43, %45 : vector<2x128xf32>
    %c0_20 = arith.constant 0 : index
    %c0_21 = arith.constant 0 : index
    %47 = vector.load %arg16[%c0_20, %c0_21] : memref<2x128xf32, #tpu.memory_space<vmem>>, vector<2x128xf32>
    tpu.vector_store %arg16[%c0_20, %c0_21], %46 {strides = array<i32>} : memref<2x128xf32, #tpu.memory_space<vmem>>, vector<2x128xf32>,
    %c0_22 = arith.constant 0 : index
    %c0_23 = arith.constant 0 : index
    %c0_24 = arith.constant 0 : index
    %48 = vector.load %arg3[%c0_22, %c0_23, %c0_24] : memref<2x64x3xf32, #tpu.memory_space<vmem>>, vector<2x64x3xf32>
    %49 = vector.shape_cast %48 : vector<2x64x3xf32> to vector<128x3xf32>
    %50 = vector.extract_strided_slice %49 {offsets = [0, 0], sizes = [128, 1], strides = [1, 1]} : vector<128x3xf32> to vector<128x1xf32>
    %51 = vector.extract_strided_slice %3 {offsets = [0, 0], sizes = [1, 128], strides = [1, 1]} : vector<3x128xf32> to vector<1x128xf32>
    %52 = vector.broadcast %50 : vector<128x1xf32> to vector<128x128xf32>
    %53 = vector.broadcast %51 : vector<1x128xf32> to vector<128x128xf32>
    %54 = arith.mulf %52, %53 : vector<128x128xf32>
    %55 = vector.extract_strided_slice %49 {offsets = [0, 1], sizes = [128, 1], strides = [1, 1]} : vector<128x3xf32> to vector<128x1xf32>
    %56 = vector.extract_strided_slice %3 {offsets = [1, 0], sizes = [1, 128], strides = [1, 1]} : vector<3x128xf32> to vector<1x128xf32>
    %57 = vector.broadcast %55 : vector<128x1xf32> to vector<128x128xf32>
    %58 = vector.broadcast %56 : vector<1x128xf32> to vector<128x128xf32>
    %59 = arith.mulf %57, %58 : vector<128x128xf32>
    %60 = arith.addf %54, %59 : vector<128x128xf32>
    %61 = vector.extract_strided_slice %49 {offsets = [0, 2], sizes = [128, 1], strides = [1, 1]} : vector<128x3xf32> to vector<128x1xf32>
    %62 = vector.extract_strided_slice %3 {offsets = [2, 0], sizes = [1, 128], strides = [1, 1]} : vector<3x128xf32> to vector<1x128xf32>
    %63 = vector.broadcast %61 : vector<128x1xf32> to vector<128x128xf32>
    %64 = vector.broadcast %62 : vector<1x128xf32> to vector<128x128xf32>
    %65 = arith.mulf %63, %64 : vector<128x128xf32>
    %66 = arith.addf %60, %65 : vector<128x128xf32>
    %67 = vector.broadcast %4 : vector<1x128xf32> to vector<128x128xf32>
    %68 = arith.addf %66, %67 : vector<128x128xf32>
    %cst_25 = arith.constant 0.000000e+00 : f32
    %69 = vector.broadcast %cst_25 : f32 to vector<128x128xf32>
    %70 = arith.maximumf %68, %69 : vector<128x128xf32>
    %c0_26 = arith.constant 0 : index
    %c0_27 = arith.constant 0 : index
    %71 = vector.load %arg17[%c0_26, %c0_27] : memref<2x128xf32, #tpu.memory_space<vmem>>, vector<2x128xf32>
    %72 = vector.shape_cast %70 : vector<128x128xf32> to vector<2x64x128xf32>
    %cst_28 = arith.constant dense<0.000000e+00> : vector<2x128xf32>
    %73 = vector.multi_reduction <add>, %72, %cst_28 [1] : vector<2x64x128xf32> to vector<2x128xf32>
    %74 = arith.addf %71, %73 : vector<2x128xf32>
    %c0_29 = arith.constant 0 : index
    %c0_30 = arith.constant 0 : index
    %75 = vector.load %arg17[%c0_29, %c0_30] : memref<2x128xf32, #tpu.memory_space<vmem>>, vector<2x128xf32>
    tpu.vector_store %arg17[%c0_29, %c0_30], %74 {strides = array<i32>} : memref<2x128xf32, #tpu.memory_space<vmem>>, vector<2x128xf32>,
    %c0_i32_31 = arith.constant 0 : i32
    %76 = arith.cmpi eq, %arg1, %c0_i32_31 : i32
    %77 = arith.extui %76 : i1 to i32
    %c0_i32_32 = arith.constant 0 : i32
    %78 = arith.cmpi ne, %77, %c0_i32_32 : i32
    scf.if %78 {
      %c0_33 = arith.constant 0 : index
      %c0_34 = arith.constant 0 : index
      %79 = vector.load %arg16[%c0_33, %c0_34] : memref<2x128xf32, #tpu.memory_space<vmem>>, vector<2x128xf32>
      %c0_35 = arith.constant 0 : index
      %c0_36 = arith.constant 0 : index
      %80 = vector.load %arg10[%c0_35, %c0_36] : memref<2x128xf32, #tpu.memory_space<vmem>>, vector<2x128xf32>
      %c0_37 = arith.constant 0 : index
      %c0_38 = arith.constant 0 : index
      %81 = vector.load %arg12[%c0_37, %c0_38] : memref<1x128xf32, #tpu.memory_space<vmem>>, vector<1x128xf32>
      %c0_39 = arith.constant 0 : index
      %c0_40 = arith.constant 0 : index
      %82 = vector.load %arg13[%c0_39, %c0_40] : memref<1x1xf32, #tpu.memory_space<vmem>>, vector<1x1xf32>
      %83 = vector.broadcast %81 : vector<1x128xf32> to vector<2x128xf32>
      %84 = arith.addf %83, %80 : vector<2x128xf32>
      %85 = arith.mulf %79, %84 : vector<2x128xf32>
      %cst_41 = arith.constant dense<0.000000e+00> : vector<2xf32>
      %86 = vector.multi_reduction <add>, %85, %cst_41 [1] : vector<2x128xf32> to vector<2xf32>
      %87 = vector.shape_cast %86 : vector<2xf32> to vector<2x1xf32>
      %88 = vector.broadcast %82 : vector<1x1xf32> to vector<2x1xf32>
      %89 = arith.addf %87, %88 : vector<2x1xf32>
      %c0_42 = arith.constant 0 : index
      %c0_43 = arith.constant 0 : index
      %90 = vector.load %arg14[%c0_42, %c0_43] : memref<2x1xf32, #tpu.memory_space<vmem>>, vector<2x1xf32>
      tpu.vector_store %arg14[%c0_42, %c0_43], %89 {strides = array<i32>} : memref<2x1xf32, #tpu.memory_space<vmem>>, vector<2x1xf32>,
      %c0_44 = arith.constant 0 : index
      %c0_45 = arith.constant 0 : index
      %91 = vector.load %arg17[%c0_44, %c0_45] : memref<2x128xf32, #tpu.memory_space<vmem>>, vector<2x128xf32>
      %c0_46 = arith.constant 0 : index
      %c0_47 = arith.constant 0 : index
      %92 = vector.load %arg11[%c0_46, %c0_47] : memref<2x128xf32, #tpu.memory_space<vmem>>, vector<2x128xf32>
      %c0_48 = arith.constant 0 : index
      %c0_49 = arith.constant 0 : index
      %93 = vector.load %arg12[%c0_48, %c0_49] : memref<1x128xf32, #tpu.memory_space<vmem>>, vector<1x128xf32>
      %c0_50 = arith.constant 0 : index
      %c0_51 = arith.constant 0 : index
      %94 = vector.load %arg13[%c0_50, %c0_51] : memref<1x1xf32, #tpu.memory_space<vmem>>, vector<1x1xf32>
      %95 = vector.broadcast %93 : vector<1x128xf32> to vector<2x128xf32>
      %96 = arith.addf %95, %92 : vector<2x128xf32>
      %97 = arith.mulf %91, %96 : vector<2x128xf32>
      %cst_52 = arith.constant dense<0.000000e+00> : vector<2xf32>
      %98 = vector.multi_reduction <add>, %97, %cst_52 [1] : vector<2x128xf32> to vector<2xf32>
      %99 = vector.shape_cast %98 : vector<2xf32> to vector<2x1xf32>
      %100 = vector.broadcast %94 : vector<1x1xf32> to vector<2x1xf32>
      %101 = arith.addf %99, %100 : vector<2x1xf32>
      %c0_53 = arith.constant 0 : index
      %c0_54 = arith.constant 0 : index
      %102 = vector.load %arg15[%c0_53, %c0_54] : memref<2x1xf32, #tpu.memory_space<vmem>>, vector<2x1xf32>
      tpu.vector_store %arg15[%c0_53, %c0_54], %101 {strides = array<i32>} : memref<2x1xf32, #tpu.memory_space<vmem>>, vector<2x1xf32>,
    } else {
    }
    return
  }
  func.func @transform_0(%arg0: i32, %arg1: i32) -> (i32, i32) {
    %c0_i32 = arith.constant 0 : i32
    %c0_i32_0 = arith.constant 0 : i32
    return %arg0, %c0_i32 : i32, i32
  }
  func.func @transform_1(%arg0: i32, %arg1: i32) -> (i32, i32, i32) {
    %c0_i32 = arith.constant 0 : i32
    %c0_i32_0 = arith.constant 0 : i32
    return %arg0, %arg1, %c0_i32 : i32, i32, i32
  }
  func.func @transform_2(%arg0: i32, %arg1: i32) -> (i32, i32) {
    %c0_i32 = arith.constant 0 : i32
    %c0_i32_0 = arith.constant 0 : i32
    return %c0_i32, %arg1 : i32, i32
  }
  func.func @transform_3(%arg0: i32, %arg1: i32) -> (i32, i32) {
    %c0_i32 = arith.constant 0 : i32
    %c0_i32_0 = arith.constant 0 : i32
    return %c0_i32, %arg1 : i32, i32
  }
  func.func @transform_4(%arg0: i32, %arg1: i32) -> (i32, i32) {
    %c0_i32 = arith.constant 0 : i32
    %c0_i32_0 = arith.constant 0 : i32
    %c0_i32_1 = arith.constant 0 : i32
    return %c0_i32, %c0_i32_0 : i32, i32
  }
  func.func @transform_5(%arg0: i32, %arg1: i32) -> (i32, i32) {
    %c0_i32 = arith.constant 0 : i32
    %c0_i32_0 = arith.constant 0 : i32
    %c0_i32_1 = arith.constant 0 : i32
    return %c0_i32, %c0_i32_0 : i32, i32
  }
  func.func @transform_6(%arg0: i32, %arg1: i32) -> (i32, i32) {
    %c0_i32 = arith.constant 0 : i32
    %c0_i32_0 = arith.constant 0 : i32
    %c0_i32_1 = arith.constant 0 : i32
    return %c0_i32, %c0_i32_0 : i32, i32
  }
  func.func @transform_7(%arg0: i32, %arg1: i32) -> (i32, i32) {
    %c0_i32 = arith.constant 0 : i32
    %c0_i32_0 = arith.constant 0 : i32
    %c0_i32_1 = arith.constant 0 : i32
    return %c0_i32, %c0_i32_0 : i32, i32
  }
  func.func @transform_8(%arg0: i32, %arg1: i32) -> (i32, i32) {
    %c0_i32 = arith.constant 0 : i32
    %c0_i32_0 = arith.constant 0 : i32
    return %arg0, %c0_i32 : i32, i32
  }
  func.func @transform_9(%arg0: i32, %arg1: i32) -> (i32, i32) {
    %c0_i32 = arith.constant 0 : i32
    %c0_i32_0 = arith.constant 0 : i32
    return %arg0, %c0_i32 : i32, i32
  }
  func.func @transform_10(%arg0: i32, %arg1: i32) -> (i32, i32) {
    %c0_i32 = arith.constant 0 : i32
    %c0_i32_0 = arith.constant 0 : i32
    %c0_i32_1 = arith.constant 0 : i32
    return %c0_i32, %c0_i32_0 : i32, i32
  }
  func.func @transform_11(%arg0: i32, %arg1: i32) -> (i32, i32) {
    %c0_i32 = arith.constant 0 : i32
    %c0_i32_0 = arith.constant 0 : i32
    %c0_i32_1 = arith.constant 0 : i32
    return %c0_i32, %c0_i32_0 : i32, i32
  }
  func.func @transform_12(%arg0: i32, %arg1: i32) -> (i32, i32) {
    %c0_i32 = arith.constant 0 : i32
    %c0_i32_0 = arith.constant 0 : i32
    return %arg0, %c0_i32 : i32, i32
  }
  func.func @transform_13(%arg0: i32, %arg1: i32) -> (i32, i32) {
    %c0_i32 = arith.constant 0 : i32
    %c0_i32_0 = arith.constant 0 : i32
    return %arg0, %c0_i32 : i32, i32
  }
}

</mosaic_0001>

<llo_original>
// kernel: tpu_custom_call.1
$region0: #{tpu_custom_call.1}
  #allocation0 [shape = 'u32[]', space=smem, size = 0x4, offset = 0x4, fixed_abs, tag = 'smem constant byte address 0x4 - core index']
  #allocation1 [shape = 'u32[72,128]{1,0:T(1,128)}', space=vmem, size = 0x9000, scoped, tag = 'internal scratch']
  #allocation2 [shape = 'f32[2,128]{1,0:T(2,128)}', space=vmem, size = 0x400, scoped, tag = 'scratch operand']
  #allocation3 [shape = 'f32[2,128]{1,0:T(2,128)}', space=vmem, size = 0x400, scoped, tag = 'scratch operand']
  #allocation4 [shape = 'f32[1,1]{1,0:T(1,128)S(1)}', space=vmem, size = 0x200, scoped, tag = 'scoped memory for tpu_custom_call.1']
  %s0 = inlined_call_operand.vmem [shape: f32[2,24], index: 0, kind: input, shape index: {}]
  %s1 = inlined_call_operand.vmem [shape: f32[2,64,3], index: 1, kind: input, shape index: {}]
  %s2 = inlined_call_operand.hbm [shape: bf16[24,8192], index: 2, kind: input, shape index: {}]
  %s3 = inlined_call_operand.vmem [shape: f32[1,8192], index: 3, kind: input, shape index: {}]
  %s4 = inlined_call_operand.vmem [shape: bf16[128,3], index: 4, kind: input, shape index: {}]
  %s5 = inlined_call_operand.vmem [shape: f32[1,3], index: 5, kind: input, shape index: {}]
  %s6 = inlined_call_operand.vmem [shape: f32[3,128], index: 6, kind: input, shape index: {}]
  %s7 = inlined_call_operand.vmem [shape: f32[1,128], index: 7, kind: input, shape index: {}]
  %s8 = inlined_call_operand.vmem [shape: f32[2,128], index: 8, kind: input, shape index: {}]
  %s9 = inlined_call_operand.vmem [shape: f32[2,128], index: 9, kind: input, shape index: {}]
  %s10 = inlined_call_operand.vmem [shape: f32[1,128], index: 10, kind: input, shape index: {}]
  %s11 = inlined_call_operand.<no memory space> [shape: f32[1,1], index: 11, kind: input, shape index: {}]
  %s12 = inlined_call_operand.vmem [shape: f32[2,1], index: 12, kind: output, shape index: {0}]
  %s13 = inlined_call_operand.vmem [shape: f32[2,1], index: 13, kind: output, shape index: {1}]
  %14 = xla_tuple %s12, %s13
  %s15 = sld [smem:[#allocation0]]
  $region78: #{tpu_custom_call.1} parent=0
    _
  %s17 = ssub.s32 1, %s15
  %s18 = scalar_select 0, %s17, %s15
  %v19 = vstv %s11
  %20 = vst [vmem:[#allocation4] sm:$0x1] %v19
  $region1: #{tpu_custom_call.1} parent=0
    #allocation5 [shape = 'u8[393216]{0}', space=vmem, size = 0x60000, scoped, tag = 'input window, operand 2, single buffered']
    #allocation6 [shape = 's32[1]{0}', space=sflag, size = 0x4, scoped, tag = 'scoped memory for tpu_custom_call.1']
    %21 = vsyncpa [#allocation6], 0
    // Predicated region
    $region2: #{tpu_custom_call.1} parent=1 // pred_check
      _
    $region3: #{tpu_custom_call.1} parent=1 // pred_check_branch
      %23 = sbr.rel (0) target = $region5
    $region4: #{tpu_custom_call.1} parent=1 // pred_region
      _
    $region5: #{tpu_custom_call.1} parent=1 // pred_fallthru
      _
    // Predicated region
    $region6: #{tpu_custom_call.1} parent=1 // pred_check
      _
    $region7: #{tpu_custom_call.1} parent=1 // pred_check_branch
      %25 = sbr.rel (0) target = $region9
    $region8: #{tpu_custom_call.1} parent=1 // pred_region
      _
    $region9: #{tpu_custom_call.1} parent=1 // pred_fallthru
      _
    // Predicated region
    $region10: #{tpu_custom_call.1} parent=1 // pred_check
      _
    $region11: #{tpu_custom_call.1} parent=1 // pred_check_branch
      %27 = sbr.rel (0) target = $region13
    $region12: #{tpu_custom_call.1} parent=1 // pred_region
      %29 = vsyncadd [#allocation6], 0
      %s30 = sshll.u32 %s2, 4
      %s31 = int_to_ptr.hbm [resolvable:$true] %s30
      %s32 = sshll.u32 [#allocation5], 4
      %s33 = int_to_ptr.vmem [resolvable:$true] %s32
      %38 = dma.hbm_to_vmem [thread:$0]  %s31, 12288, %s33, [#allocation6], 4096, 4096, 256
    $region13: #{tpu_custom_call.1} parent=1 // pred_fallthru
      _
    // Predicated region
    $region14: #{tpu_custom_call.1} parent=1 // pred_check
      _
    $region15: #{tpu_custom_call.1} parent=1 // pred_check_branch
      %40 = sbr.rel (0) target = $region17
    $region16: #{tpu_custom_call.1} parent=1 // pred_region
      _
    $region17: #{tpu_custom_call.1} parent=1 // pred_fallthru
      _
    // Predicated region
    $region18: #{tpu_custom_call.1} parent=1 // pred_check
      _
    $region19: #{tpu_custom_call.1} parent=1 // pred_check_branch
      %42 = sbr.rel (0) target = $region21
    $region20: #{tpu_custom_call.1} parent=1 // pred_region
      _
    $region21: #{tpu_custom_call.1} parent=1 // pred_fallthru
      _
    // Predicated region
    $region22: #{tpu_custom_call.1} parent=1 // pred_check
      _
    $region23: #{tpu_custom_call.1} parent=1 // pred_check_branch
      %44 = sbr.rel (0) target = $region25
    $region24: #{tpu_custom_call.1} parent=1 // pred_region
      _
    $region25: #{tpu_custom_call.1} parent=1 // pred_fallthru
      _
    // Predicated region
    $region26: #{tpu_custom_call.1} parent=1 // pred_check
      _
    $region27: #{tpu_custom_call.1} parent=1 // pred_check_branch
      %46 = sbr.rel (0) target = $region29
    $region28: #{tpu_custom_call.1} parent=1 // pred_region
      _
    $region29: #{tpu_custom_call.1} parent=1 // pred_fallthru
      _
    // Predicated region
    $region30: #{tpu_custom_call.1} parent=1 // pred_check
      _
    $region31: #{tpu_custom_call.1} parent=1 // pred_check_branch
      %48 = sbr.rel (0) target = $region33
    $region32: #{tpu_custom_call.1} parent=1 // pred_region
      _
    $region33: #{tpu_custom_call.1} parent=1 // pred_fallthru
      _
    // Predicated region
    $region34: #{tpu_custom_call.1} parent=1 // pred_check
      _
    $region35: #{tpu_custom_call.1} parent=1 // pred_check_branch
      %50 = sbr.rel (0) target = $region37
    $region36: #{tpu_custom_call.1} parent=1 // pred_region
      _
    $region37: #{tpu_custom_call.1} parent=1 // pred_fallthru
      _
    // Predicated region
    $region38: #{tpu_custom_call.1} parent=1 // pred_check
      _
    $region39: #{tpu_custom_call.1} parent=1 // pred_check_branch
      %52 = sbr.rel (0) target = $region41
    $region40: #{tpu_custom_call.1} parent=1 // pred_region
      _
    $region41: #{tpu_custom_call.1} parent=1 // pred_fallthru
      _
    // Predicated region
    $region42: #{tpu_custom_call.1} parent=1 // pred_check
      _
    $region43: #{tpu_custom_call.1} parent=1 // pred_check_branch
      %54 = sbr.rel (0) target = $region45
    $region44: #{tpu_custom_call.1} parent=1 // pred_region
      _
    $region45: #{tpu_custom_call.1} parent=1 // pred_fallthru
      _
    // Predicated region
    $region46: #{tpu_custom_call.1} parent=1 // pred_check
      _
    $region47: #{tpu_custom_call.1} parent=1 // pred_check_branch
      %56 = sbr.rel (0) target = $region49
    $region48: #{tpu_custom_call.1} parent=1 // pred_region
      _
    $region49: #{tpu_custom_call.1} parent=1 // pred_fallthru
      _
    // Predicated region
    $region50: #{tpu_custom_call.1} parent=1 // pred_check
      _
    $region51: #{tpu_custom_call.1} parent=1 // pred_check_branch
      %58 = sbr.rel (0) target = $region53
    $region52: #{tpu_custom_call.1} parent=1 // pred_region
      %60 = dma.done [#allocation6], 12288
    $region53: #{tpu_custom_call.1} parent=1 // pred_fallthru
      _
    %p62 = scmp.eq.s32.totalorder 0, 0
    // Predicated region
    $region54: #{tpu_custom_call.1} parent=1 // pred_check
      %p63 = pneg %p62
    $region55: #{tpu_custom_call.1} parent=1 // pred_check_branch
      %65 = sbr.rel (%p63) target = $region57
    $region56: #{tpu_custom_call.1} parent=1 // pred_region
      %66 = vst [vmem:[#allocation2] sm:$0x3] 0.0
      %67 = vst [vmem:[#allocation3] sm:$0x3] 0.0
    $region57: #{tpu_custom_call.1} parent=1 // pred_fallthru
      _
    %v68 = vld [vmem:[%s6] sm:$0x7]
    %v69 = vld [vmem:[%s7] sm:$0x1]
    %v70 = vld [vmem:[%s0] sm:$0x3]
    %v71 = vld [vmem:[#allocation5] sm:$0xff]
    %v72 = vld [vmem:[#allocation5 + $0x8] sm:$0xff]
    %v73 = vld [vmem:[#allocation5 + $0x10] sm:$0xff]
    %v74 = vld [vmem:[#allocation5 + $0x18] sm:$0xff]
    %v75 = vld [vmem:[#allocation5 + $0x20] sm:$0xff]
    %v76 = vld [vmem:[#allocation5 + $0x28] sm:$0xff]
    %v77 = vld [vmem:[#allocation5 + $0x30] sm:$0xff]
    %v78 = vld [vmem:[#allocation5 + $0x38] sm:$0xff]
    %v79 = vld [vmem:[#allocation5 + $0x40] sm:$0xff]
    %v80 = vld [vmem:[#allocation5 + $0x48] sm:$0xff]
    %v81 = vld [vmem:[#allocation5 + $0x50] sm:$0xff]
    %v82 = vld [vmem:[#allocation5 + $0x58] sm:$0xff]
    %v83 = vld [vmem:[#allocation5 + $0x60] sm:$0xff]
    %v84 = vld [vmem:[#allocation5 + $0x68] sm:$0xff]
    %v85 = vld [vmem:[#allocation5 + $0x70] sm:$0xff]
    %v86 = vld [vmem:[#allocation5 + $0x78] sm:$0xff]
    %v87 = vld [vmem:[#allocation5 + $0x80] sm:$0xff]
    %v88 = vld [vmem:[#allocation5 + $0x88] sm:$0xff]
    %v89 = vld [vmem:[#allocation5 + $0x90] sm:$0xff]
    %v90 = vld [vmem:[#allocation5 + $0x98] sm:$0xff]
    %v91 = vld [vmem:[#allocation5 + $0xa0] sm:$0xff]
    %v92 = vld [vmem:[#allocation5 + $0xa8] sm:$0xff]
    %v93 = vld [vmem:[#allocation5 + $0xb0] sm:$0xff]
    %v94 = vld [vmem:[#allocation5 + $0xb8] sm:$0xff]
    %v95 = vld [vmem:[#allocation5 + $0xc0] sm:$0xff]
    %v96 = vld [vmem:[#allocation5 + $0xc8] sm:$0xff]
    %v97 = vld [vmem:[#allocation5 + $0xd0] sm:$0xff]
    %v98 = vld [vmem:[#allocation5 + $0xd8] sm:$0xff]
    %v99 = vld [vmem:[#allocation5 + $0xe0] sm:$0xff]
    %v100 = vld [vmem:[#allocation5 + $0xe8] sm:$0xff]
    %v101 = vld [vmem:[#allocation5 + $0xf0] sm:$0xff]
    %v102 = vld [vmem:[#allocation5 + $0xf8] sm:$0xff]
    %v103 = vld [vmem:[#allocation5 + $0x100] sm:$0xff]
    %v104 = vld [vmem:[#allocation5 + $0x108] sm:$0xff]
    %v105 = vld [vmem:[#allocation5 + $0x110] sm:$0xff]
    %v106 = vld [vmem:[#allocation5 + $0x118] sm:$0xff]
    %v107 = vld [vmem:[#allocation5 + $0x120] sm:$0xff]
    %v108 = vld [vmem:[#allocation5 + $0x128] sm:$0xff]
    %v109 = vld [vmem:[#allocation5 + $0x130] sm:$0xff]
    %v110 = vld [vmem:[#allocation5 + $0x138] sm:$0xff]
    %v111 = vld [vmem:[#allocation5 + $0x140] sm:$0xff]
    %v112 = vld [vmem:[#allocation5 + $0x148] sm:$0xff]
    %v113 = vld [vmem:[#allocation5 + $0x150] sm:$0xff]
    %v114 = vld [vmem:[#allocation5 + $0x158] sm:$0xff]
    %v115 = vld [vmem:[#allocation5 + $0x160] sm:$0xff]
    %v116 = vld [vmem:[#allocation5 + $0x168] sm:$0xff]
    %v117 = vld [vmem:[#allocation5 + $0x170] sm:$0xff]
    %v118 = vld [vmem:[#allocation5 + $0x178] sm:$0xff]
    %v119 = vld [vmem:[#allocation5 + $0x180] sm:$0xff]
    %v120 = vld [vmem:[#allocation5 + $0x188] sm:$0xff]
    %v121 = vld [vmem:[#allocation5 + $0x190] sm:$0xff]
    %v122 = vld [vmem:[#allocation5 + $0x198] sm:$0xff]
    %v123 = vld [vmem:[#allocation5 + $0x1a0] sm:$0xff]
    %v124 = vld [vmem:[#allocation5 + $0x1a8] sm:$0xff]
    %v125 = vld [vmem:[#allocation5 + $0x1b0] sm:$0xff]
    %v126 = vld [vmem:[#allocation5 + $0x1b8] sm:$0xff]
    %v127 = vld [vmem:[#allocation5 + $0x1c0] sm:$0xff]
    %v128 = vld [vmem:[#allocation5 + $0x1c8] sm:$0xff]
    %v129 = vld [vmem:[#allocation5 + $0x1d0] sm:$0xff]
    %v130 = vld [vmem:[#allocation5 + $0x1d8] sm:$0xff]
    %v131 = vld [vmem:[#allocation5 + $0x1e0] sm:$0xff]
    %v132 = vld [vmem:[#allocation5 + $0x1e8] sm:$0xff]
    %v133 = vld [vmem:[#allocation5 + $0x1f0] sm:$0xff]
    %v134 = vld [vmem:[#allocation5 + $0x1f8] sm:$0xff]
    %v135 = vld [vmem:[#allocation5 + $0x200] sm:$0xff]
    %v136 = vld [vmem:[#allocation5 + $0x208] sm:$0xff]
    %v137 = vld [vmem:[#allocation5 + $0x210] sm:$0xff]
    %v138 = vld [vmem:[#allocation5 + $0x218] sm:$0xff]
    %v139 = vld [vmem:[#allocation5 + $0x220] sm:$0xff]
    %v140 = vld [vmem:[#allocation5 + $0x228] sm:$0xff]
    %v141 = vld [vmem:[#allocation5 + $0x230] sm:$0xff]
    %v142 = vld [vmem:[#allocation5 + $0x238] sm:$0xff]
    %v143 = vld [vmem:[#allocation5 + $0x240] sm:$0xff]
    %v144 = vld [vmem:[#allocation5 + $0x248] sm:$0xff]
    %v145 = vld [vmem:[#allocation5 + $0x250] sm:$0xff]
    %v146 = vld [vmem:[#allocation5 + $0x258] sm:$0xff]
    %v147 = vld [vmem:[#allocation5 + $0x260] sm:$0xff]
    %v148 = vld [vmem:[#allocation5 + $0x268] sm:$0xff]
    %v149 = vld [vmem:[#allocation5 + $0x270] sm:$0xff]
    %v150 = vld [vmem:[#allocation5 + $0x278] sm:$0xff]
    %v151 = vld [vmem:[#allocation5 + $0x280] sm:$0xff]
    %v152 = vld [vmem:[#allocation5 + $0x288] sm:$0xff]
    %v153 = vld [vmem:[#allocation5 + $0x290] sm:$0xff]
    %v154 = vld [vmem:[#allocation5 + $0x298] sm:$0xff]
    %v155 = vld [vmem:[#allocation5 + $0x2a0] sm:$0xff]
    %v156 = vld [vmem:[#allocation5 + $0x2a8] sm:$0xff]
    %v157 = vld [vmem:[#allocation5 + $0x2b0] sm:$0xff]
    %v158 = vld [vmem:[#allocation5 + $0x2b8] sm:$0xff]
    %v159 = vld [vmem:[#allocation5 + $0x2c0] sm:$0xff]
    %v160 = vld [vmem:[#allocation5 + $0x2c8] sm:$0xff]
    %v161 = vld [vmem:[#allocation5 + $0x2d0] sm:$0xff]
    %v162 = vld [vmem:[#allocation5 + $0x2d8] sm:$0xff]
    %v163 = vld [vmem:[#allocation5 + $0x2e0] sm:$0xff]
    %v164 = vld [vmem:[#allocation5 + $0x2e8] sm:$0xff]
    %v165 = vld [vmem:[#allocation5 + $0x2f0] sm:$0xff]
    %v166 = vld [vmem:[#allocation5 + $0x2f8] sm:$0xff]
    %v167 = vld [vmem:[%s3] sm:$0xff]
    %v168 = vld [vmem:[%s3 + $0x8] sm:$0xff]
    %v169 = vld [vmem:[%s3 + $0x10] sm:$0xff]
    %v170 = vld [vmem:[%s3 + $0x18] sm:$0xff]
    %v171 = vld [vmem:[%s3 + $0x20] sm:$0xff]
    %v172 = vld [vmem:[%s3 + $0x28] sm:$0xff]
    %v173 = vld [vmem:[%s3 + $0x30] sm:$0xff]
    %v174 = vld [vmem:[%s3 + $0x38] sm:$0xff]
    %v175 = vld [vmem:[%s4] sm:$0xf]
    %v176 = vld [vmem:[%s4 + $0x4] sm:$0xf]
    %v177 = vld [vmem:[%s4 + $0x8] sm:$0xf]
    %v178 = vld [vmem:[%s4 + $0xc] sm:$0xf]
    %v179 = vld [vmem:[%s4 + $0x10] sm:$0xf]
    %v180 = vld [vmem:[%s4 + $0x14] sm:$0xf]
    %v181 = vld [vmem:[%s4 + $0x18] sm:$0xf]
    %v182 = vld [vmem:[%s4 + $0x1c] sm:$0xf]
    %v183 = vld [vmem:[%s4 + $0x20] sm:$0xf]
    %v184 = vld [vmem:[%s4 + $0x24] sm:$0xf]
    %v185 = vld [vmem:[%s4 + $0x28] sm:$0xf]
    %v186 = vld [vmem:[%s4 + $0x2c] sm:$0xf]
    %v187 = vld [vmem:[%s4 + $0x30] sm:$0xf]
    %v188 = vld [vmem:[%s4 + $0x34] sm:$0xf]
    %v189 = vld [vmem:[%s4 + $0x38] sm:$0xf]
    %v190 = vld [vmem:[%s4 + $0x3c] sm:$0xf]
    %v191 = vld [vmem:[%s5] sm:$0x1]
    %v192 = vpack.c.bf16 %v70, %v70
    %v201 = vperm.slane %v167, 0
    %v202 = vperm.slane %v167, 1
    %v203 = vperm.slane %v167, 2
    %v204 = vperm.slane %v167, 3
    %v205 = vperm.slane %v167, 4
    %v206 = vperm.slane %v167, 5
    %v207 = vperm.slane %v167, 6
    %v208 = vperm.slane %v167, 7
    %v209 = vperm.slane %v168, 0
    %v210 = vperm.slane %v168, 1
    %v211 = vperm.slane %v168, 2
    %v212 = vperm.slane %v168, 3
    %v213 = vperm.slane %v168, 4
    %v214 = vperm.slane %v168, 5
    %v215 = vperm.slane %v168, 6
    %v216 = vperm.slane %v168, 7
    %v217 = vperm.slane %v169, 0
    %v218 = vperm.slane %v169, 1
    %v219 = vperm.slane %v169, 2
    %v220 = vperm.slane %v169, 3
    %v221 = vperm.slane %v169, 4
    %v222 = vperm.slane %v169, 5
    %v223 = vperm.slane %v169, 6
    %v224 = vperm.slane %v169, 7
    %v225 = vperm.slane %v170, 0
    %v226 = vperm.slane %v170, 1
    %v227 = vperm.slane %v170, 2
    %v228 = vperm.slane %v170, 3
    %v229 = vperm.slane %v170, 4
    %v230 = vperm.slane %v170, 5
    %v231 = vperm.slane %v170, 6
    %v232 = vperm.slane %v170, 7
    %v233 = vperm.slane %v171, 0
    %v234 = vperm.slane %v171, 1
    %v235 = vperm.slane %v171, 2
    %v236 = vperm.slane %v171, 3
    %v237 = vperm.slane %v171, 4
    %v238 = vperm.slane %v171, 5
    %v239 = vperm.slane %v171, 6
    %v240 = vperm.slane %v171, 7
    %v241 = vperm.slane %v172, 0
    %v242 = vperm.slane %v172, 1
    %v243 = vperm.slane %v172, 2
    %v244 = vperm.slane %v172, 3
    %v245 = vperm.slane %v172, 4
    %v246 = vperm.slane %v172, 5
    %v247 = vperm.slane %v172, 6
    %v248 = vperm.slane %v172, 7
    %v249 = vperm.slane %v173, 0
    %v250 = vperm.slane %v173, 1
    %v251 = vperm.slane %v173, 2
    %v252 = vperm.slane %v173, 3
    %v253 = vperm.slane %v173, 4
    %v254 = vperm.slane %v173, 5
    %v255 = vperm.slane %v173, 6
    %v256 = vperm.slane %v173, 7
    %v257 = vperm.slane %v174, 0
    %v258 = vperm.slane %v174, 1
    %v259 = vperm.slane %v174, 2
    %v260 = vperm.slane %v174, 3
    %v261 = vperm.slane %v174, 4
    %v262 = vperm.slane %v174, 5
    %v263 = vperm.slane %v174, 6
    %v264 = vperm.slane %v174, 7
    %v425 = vunpack.c.l.b16 %v71
    %v426 = vunpack.c.h.b16 %v71
    %v427 = vunpack.c.l.b16 %v72
    %v428 = vunpack.c.h.b16 %v72
    %v429 = vunpack.c.l.b16 %v73
    %v430 = vunpack.c.h.b16 %v73
    %v431 = vunpack.c.l.b16 %v74
    %v432 = vunpack.c.h.b16 %v74
    %v433 = vunpack.c.l.b16 %v75
    %v434 = vunpack.c.h.b16 %v75
    %v435 = vunpack.c.l.b16 %v76
    %v436 = vunpack.c.h.b16 %v76
    %v437 = vunpack.c.l.b16 %v77
    %v438 = vunpack.c.h.b16 %v77
    %v439 = vunpack.c.l.b16 %v78
    %v440 = vunpack.c.h.b16 %v78
    %v441 = vunpack.c.l.b16 %v79
    %v442 = vunpack.c.h.b16 %v79
    %v443 = vunpack.c.l.b16 %v80
    %v444 = vunpack.c.h.b16 %v80
    %v445 = vunpack.c.l.b16 %v81
    %v446 = vunpack.c.h.b16 %v81
    %v447 = vunpack.c.l.b16 %v82
    %v448 = vunpack.c.h.b16 %v82
    %v449 = vunpack.c.l.b16 %v83
    %v450 = vunpack.c.h.b16 %v83
    %v451 = vunpack.c.l.b16 %v84
    %v452 = vunpack.c.h.b16 %v84
    %v453 = vunpack.c.l.b16 %v85
    %v454 = vunpack.c.h.b16 %v85
    %v455 = vunpack.c.l.b16 %v86
    %v456 = vunpack.c.h.b16 %v86
    %v457 = vunpack.c.l.b16 %v87
    %v458 = vunpack.c.h.b16 %v87
    %v459 = vunpack.c.l.b16 %v88
    %v460 = vunpack.c.h.b16 %v88
    %v461 = vunpack.c.l.b16 %v89
    %v462 = vunpack.c.h.b16 %v89
    %v463 = vunpack.c.l.b16 %v90
    %v464 = vunpack.c.h.b16 %v90
    %v465 = vunpack.c.l.b16 %v91
    %v466 = vunpack.c.h.b16 %v91
    %v467 = vunpack.c.l.b16 %v92
    %v468 = vunpack.c.h.b16 %v92
    %v469 = vunpack.c.l.b16 %v93
    %v470 = vunpack.c.h.b16 %v93
    %v471 = vunpack.c.l.b16 %v94
    %v472 = vunpack.c.h.b16 %v94
    %v473 = vunpack.c.l.b16 %v95
    %v474 = vunpack.c.h.b16 %v95
    %v475 = vunpack.c.l.b16 %v96
    %v476 = vunpack.c.h.b16 %v96
    %v477 = vunpack.c.l.b16 %v97
    %v478 = vunpack.c.h.b16 %v97
    %v479 = vunpack.c.l.b16 %v98
    %v480 = vunpack.c.h.b16 %v98
    %v481 = vunpack.c.l.b16 %v99
    %v482 = vunpack.c.h.b16 %v99
    %v483 = vunpack.c.l.b16 %v100
    %v484 = vunpack.c.h.b16 %v100
    %v485 = vunpack.c.l.b16 %v101
    %v486 = vunpack.c.h.b16 %v101
    %v487 = vunpack.c.l.b16 %v102
    %v488 = vunpack.c.h.b16 %v102
    %v489 = vunpack.c.l.b16 %v103
    %v490 = vunpack.c.h.b16 %v103
    %v491 = vunpack.c.l.b16 %v104
    %v492 = vunpack.c.h.b16 %v104
    %v493 = vunpack.c.l.b16 %v105
    %v494 = vunpack.c.h.b16 %v105
    %v495 = vunpack.c.l.b16 %v106
    %v496 = vunpack.c.h.b16 %v106
    %v497 = vunpack.c.l.b16 %v107
    %v498 = vunpack.c.h.b16 %v107
    %v499 = vunpack.c.l.b16 %v108
    %v500 = vunpack.c.h.b16 %v108
    %v501 = vunpack.c.l.b16 %v109
    %v502 = vunpack.c.h.b16 %v109
    %v503 = vunpack.c.l.b16 %v110
    %v504 = vunpack.c.h.b16 %v110
    %v505 = vunpack.c.l.b16 %v111
    %v506 = vunpack.c.h.b16 %v111
    %v507 = vunpack.c.l.b16 %v112
    %v508 = vunpack.c.h.b16 %v112
    %v509 = vunpack.c.l.b16 %v113
    %v510 = vunpack.c.h.b16 %v113
    %v511 = vunpack.c.l.b16 %v114
    %v512 = vunpack.c.h.b16 %v114
    %v513 = vunpack.c.l.b16 %v115
    %v514 = vunpack.c.h.b16 %v115
    %v515 = vunpack.c.l.b16 %v116
    %v516 = vunpack.c.h.b16 %v116
    %v517 = vunpack.c.l.b16 %v117
    %v518 = vunpack.c.h.b16 %v117
    %v519 = vunpack.c.l.b16 %v118
    %v520 = vunpack.c.h.b16 %v118
    %v521 = vunpack.c.l.b16 %v119
    %v522 = vunpack.c.h.b16 %v119
    %v523 = vunpack.c.l.b16 %v120
    %v524 = vunpack.c.h.b16 %v120
    %v525 = vunpack.c.l.b16 %v121
    %v526 = vunpack.c.h.b16 %v121
    %v527 = vunpack.c.l.b16 %v122
    %v528 = vunpack.c.h.b16 %v122
    %v529 = vunpack.c.l.b16 %v123
    %v530 = vunpack.c.h.b16 %v123
    %v531 = vunpack.c.l.b16 %v124
    %v532 = vunpack.c.h.b16 %v124
    %v533 = vunpack.c.l.b16 %v125
    %v534 = vunpack.c.h.b16 %v125
    %v535 = vunpack.c.l.b16 %v126
    %v536 = vunpack.c.h.b16 %v126
    %v537 = vunpack.c.l.b16 %v127
    %v538 = vunpack.c.h.b16 %v127
    %v539 = vunpack.c.l.b16 %v128
    %v540 = vunpack.c.h.b16 %v128
    %v541 = vunpack.c.l.b16 %v129
    %v542 = vunpack.c.h.b16 %v129
    %v543 = vunpack.c.l.b16 %v130
    %v544 = vunpack.c.h.b16 %v130
    %v545 = vunpack.c.l.b16 %v131
    %v546 = vunpack.c.h.b16 %v131
    %v547 = vunpack.c.l.b16 %v132
    %v548 = vunpack.c.h.b16 %v132
    %v549 = vunpack.c.l.b16 %v133
    %v550 = vunpack.c.h.b16 %v133
    %v551 = vunpack.c.l.b16 %v134
    %v552 = vunpack.c.h.b16 %v134
    %v553 = vunpack.c.l.b16 %v135
    %v554 = vunpack.c.h.b16 %v135
    %v555 = vunpack.c.l.b16 %v136
    %v556 = vunpack.c.h.b16 %v136
    %v557 = vunpack.c.l.b16 %v137
    %v558 = vunpack.c.h.b16 %v137
    %v559 = vunpack.c.l.b16 %v138
    %v560 = vunpack.c.h.b16 %v138
    %v561 = vunpack.c.l.b16 %v139
    %v562 = vunpack.c.h.b16 %v139
    %v563 = vunpack.c.l.b16 %v140
    %v564 = vunpack.c.h.b16 %v140
    %v565 = vunpack.c.l.b16 %v141
    %v566 = vunpack.c.h.b16 %v141
    %v567 = vunpack.c.l.b16 %v142
    %v568 = vunpack.c.h.b16 %v142
    %v569 = vunpack.c.l.b16 %v143
    %v570 = vunpack.c.h.b16 %v143
    %v571 = vunpack.c.l.b16 %v144
    %v572 = vunpack.c.h.b16 %v144
    %v573 = vunpack.c.l.b16 %v145
    %v574 = vunpack.c.h.b16 %v145
    %v575 = vunpack.c.l.b16 %v146
    %v576 = vunpack.c.h.b16 %v146
    %v577 = vunpack.c.l.b16 %v147
    %v578 = vunpack.c.h.b16 %v147
    %v579 = vunpack.c.l.b16 %v148
    %v580 = vunpack.c.h.b16 %v148
    %v581 = vunpack.c.l.b16 %v149
    %v582 = vunpack.c.h.b16 %v149
    %v583 = vunpack.c.l.b16 %v150
    %v584 = vunpack.c.h.b16 %v150
    %v585 = vunpack.c.l.b16 %v151
    %v586 = vunpack.c.h.b16 %v151
    %v587 = vunpack.c.l.b16 %v152
    %v588 = vunpack.c.h.b16 %v152
    %v589 = vunpack.c.l.b16 %v153
    %v590 = vunpack.c.h.b16 %v153
    %v591 = vunpack.c.l.b16 %v154
    %v592 = vunpack.c.h.b16 %v154
    %v593 = vunpack.c.l.b16 %v155
    %v594 = vunpack.c.h.b16 %v155
    %v595 = vunpack.c.l.b16 %v156
    %v596 = vunpack.c.h.b16 %v156
    %v597 = vunpack.c.l.b16 %v157
    %v598 = vunpack.c.h.b16 %v157
    %v599 = vunpack.c.l.b16 %v158
    %v600 = vunpack.c.h.b16 %v158
    %v601 = vunpack.c.l.b16 %v159
    %v602 = vunpack.c.h.b16 %v159
    %v603 = vunpack.c.l.b16 %v160
    %v604 = vunpack.c.h.b16 %v160
    %v605 = vunpack.c.l.b16 %v161
    %v606 = vunpack.c.h.b16 %v161
    %v607 = vunpack.c.l.b16 %v162
    %v608 = vunpack.c.h.b16 %v162
    %v609 = vunpack.c.l.b16 %v163
    %v610 = vunpack.c.h.b16 %v163
    %v611 = vunpack.c.l.b16 %v164
    %v612 = vunpack.c.h.b16 %v164
    %v613 = vunpack.c.l.b16 %v165
    %v614 = vunpack.c.h.b16 %v165
    %v615 = vunpack.c.l.b16 %v166
    %v616 = vunpack.c.h.b16 %v166
    %v617 = vpack.c.b16 %v489, %v425
    %v618 = vpack.c.b16 %v490, %v426
    %v619 = vpack.c.b16 %v491, %v427
    %v620 = vpack.c.b16 %v492, %v428
    %v621 = vpack.c.b16 %v493, %v429
    %v622 = vpack.c.b16 %v494, %v430
    %v623 = vpack.c.b16 %v495, %v431
    %v624 = vpack.c.b16 %v496, %v432
    %v625 = vpack.c.b16 %v497, %v433
    %v626 = vpack.c.b16 %v498, %v434
    %v627 = vpack.c.b16 %v499, %v435
    %v628 = vpack.c.b16 %v500, %v436
    %v629 = vpack.c.b16 %v501, %v437
    %v630 = vpack.c.b16 %v502, %v438
    %v631 = vpack.c.b16 %v503, %v439
    %v632 = vpack.c.b16 %v504, %v440
    %v633 = vpack.c.b16 %v505, %v441
    %v634 = vpack.c.b16 %v506, %v442
    %v635 = vpack.c.b16 %v507, %v443
    %v636 = vpack.c.b16 %v508, %v444
    %v637 = vpack.c.b16 %v509, %v445
    %v638 = vpack.c.b16 %v510, %v446
    %v639 = vpack.c.b16 %v511, %v447
    %v640 = vpack.c.b16 %v512, %v448
    %v641 = vpack.c.b16 %v513, %v449
    %v642 = vpack.c.b16 %v514, %v450
    %v643 = vpack.c.b16 %v515, %v451
    %v644 = vpack.c.b16 %v516, %v452
    %v645 = vpack.c.b16 %v517, %v453
    %v646 = vpack.c.b16 %v518, %v454
    %v647 = vpack.c.b16 %v519, %v455
    %v648 = vpack.c.b16 %v520, %v456
    %v649 = vpack.c.b16 %v521, %v457
    %v650 = vpack.c.b16 %v522, %v458
    %v651 = vpack.c.b16 %v523, %v459
    %v652 = vpack.c.b16 %v524, %v460
    %v653 = vpack.c.b16 %v525, %v461
    %v654 = vpack.c.b16 %v526, %v462
    %v655 = vpack.c.b16 %v527, %v463
    %v656 = vpack.c.b16 %v528, %v464
    %v657 = vpack.c.b16 %v529, %v465
    %v658 = vpack.c.b16 %v530, %v466
    %v659 = vpack.c.b16 %v531, %v467
    %v660 = vpack.c.b16 %v532, %v468
    %v661 = vpack.c.b16 %v533, %v469
    %v662 = vpack.c.b16 %v534, %v470
    %v663 = vpack.c.b16 %v535, %v471
    %v664 = vpack.c.b16 %v536, %v472
    %v665 = vpack.c.b16 %v537, %v473
    %v666 = vpack.c.b16 %v538, %v474
    %v667 = vpack.c.b16 %v539, %v475
    %v668 = vpack.c.b16 %v540, %v476
    %v669 = vpack.c.b16 %v541, %v477
    %v670 = vpack.c.b16 %v542, %v478
    %v671 = vpack.c.b16 %v543, %v479
    %v672 = vpack.c.b16 %v544, %v480
    %v673 = vpack.c.b16 %v545, %v481
    %v674 = vpack.c.b16 %v546, %v482
    %v675 = vpack.c.b16 %v547, %v483
    %v676 = vpack.c.b16 %v548, %v484
    %v677 = vpack.c.b16 %v549, %v485
    %v678 = vpack.c.b16 %v550, %v486
    %v679 = vpack.c.b16 %v551, %v487
    %v680 = vpack.c.b16 %v552, %v488
    %v681 = vpack.c.b16 %v553, %v553
    %v682 = vpack.c.b16 %v554, %v554
    %v683 = vpack.c.b16 %v555, %v555
    %v684 = vpack.c.b16 %v556, %v556
    %v685 = vpack.c.b16 %v557, %v557
    %v686 = vpack.c.b16 %v558, %v558
    %v687 = vpack.c.b16 %v559, %v559
    %v688 = vpack.c.b16 %v560, %v560
    %v689 = vpack.c.b16 %v561, %v561
    %v690 = vpack.c.b16 %v562, %v562
    %v691 = vpack.c.b16 %v563, %v563
    %v692 = vpack.c.b16 %v564, %v564
    %v693 = vpack.c.b16 %v565, %v565
    %v694 = vpack.c.b16 %v566, %v566
    %v695 = vpack.c.b16 %v567, %v567
    %v696 = vpack.c.b16 %v568, %v568
    %v697 = vpack.c.b16 %v569, %v569
    %v698 = vpack.c.b16 %v570, %v570
    %v699 = vpack.c.b16 %v571, %v571
    %v700 = vpack.c.b16 %v572, %v572
    %v701 = vpack.c.b16 %v573, %v573
    %v702 = vpack.c.b16 %v574, %v574
    %v703 = vpack.c.b16 %v575, %v575
    %v704 = vpack.c.b16 %v576, %v576
    %v705 = vpack.c.b16 %v577, %v577
    %v706 = vpack.c.b16 %v578, %v578
    %v707 = vpack.c.b16 %v579, %v579
    %v708 = vpack.c.b16 %v580, %v580
    %v709 = vpack.c.b16 %v581, %v581
    %v710 = vpack.c.b16 %v582, %v582
    %v711 = vpack.c.b16 %v583, %v583
    %v712 = vpack.c.b16 %v584, %v584
    %v713 = vpack.c.b16 %v585, %v585
    %v714 = vpack.c.b16 %v586, %v586
    %v715 = vpack.c.b16 %v587, %v587
    %v716 = vpack.c.b16 %v588, %v588
    %v717 = vpack.c.b16 %v589, %v589
    %v718 = vpack.c.b16 %v590, %v590
    %v719 = vpack.c.b16 %v591, %v591
    %v720 = vpack.c.b16 %v592, %v592
    %v721 = vpack.c.b16 %v593, %v593
    %v722 = vpack.c.b16 %v594, %v594
    %v723 = vpack.c.b16 %v595, %v595
    %v724 = vpack.c.b16 %v596, %v596
    %v725 = vpack.c.b16 %v597, %v597
    %v726 = vpack.c.b16 %v598, %v598
    %v727 = vpack.c.b16 %v599, %v599
    %v728 = vpack.c.b16 %v600, %v600
    %v729 = vpack.c.b16 %v601, %v601
    %v730 = vpack.c.b16 %v602, %v602
    %v731 = vpack.c.b16 %v603, %v603
    %v732 = vpack.c.b16 %v604, %v604
    %v733 = vpack.c.b16 %v605, %v605
    %v734 = vpack.c.b16 %v606, %v606
    %v735 = vpack.c.b16 %v607, %v607
    %v736 = vpack.c.b16 %v608, %v608
    %v737 = vpack.c.b16 %v609, %v609
    %v738 = vpack.c.b16 %v610, %v610
    %v739 = vpack.c.b16 %v611, %v611
    %v740 = vpack.c.b16 %v612, %v612
    %v741 = vpack.c.b16 %v613, %v613
    %v742 = vpack.c.b16 %v614, %v614
    %v743 = vpack.c.b16 %v615, %v615
    %v744 = vpack.c.b16 %v616, %v616
    %vm809 = vcmask 195584
    %v811 = vsel %vm809, %v192, 0
    %vm813 = vcmask 1043456
    %v815 = vsel %vm813, %v681, 0
    %v818 = vsel %vm813, %v682, 0
    %v821 = vsel %vm813, %v683, 0
    %v824 = vsel %vm813, %v684, 0
    %v827 = vsel %vm813, %v685, 0
    %v830 = vsel %vm813, %v686, 0
    %v833 = vsel %vm813, %v687, 0
    %v836 = vsel %vm813, %v688, 0
    %v839 = vsel %vm813, %v689, 0
    %v842 = vsel %vm813, %v690, 0
    %v845 = vsel %vm813, %v691, 0
    %v848 = vsel %vm813, %v692, 0
    %v851 = vsel %vm813, %v693, 0
    %v854 = vsel %vm813, %v694, 0
    %v857 = vsel %vm813, %v695, 0
    %v860 = vsel %vm813, %v696, 0
    %v863 = vsel %vm813, %v697, 0
    %v866 = vsel %vm813, %v698, 0
    %v869 = vsel %vm813, %v699, 0
    %v872 = vsel %vm813, %v700, 0
    %v875 = vsel %vm813, %v701, 0
    %v878 = vsel %vm813, %v702, 0
    %v881 = vsel %vm813, %v703, 0
    %v884 = vsel %vm813, %v704, 0
    %v887 = vsel %vm813, %v705, 0
    %v890 = vsel %vm813, %v706, 0
    %v893 = vsel %vm813, %v707, 0
    %v896 = vsel %vm813, %v708, 0
    %v899 = vsel %vm813, %v709, 0
    %v902 = vsel %vm813, %v710, 0
    %v905 = vsel %vm813, %v711, 0
    %v908 = vsel %vm813, %v712, 0
    %v911 = vsel %vm813, %v713, 0
    %v914 = vsel %vm813, %v714, 0
    %v917 = vsel %vm813, %v715, 0
    %v920 = vsel %vm813, %v716, 0
    %v923 = vsel %vm813, %v717, 0
    %v926 = vsel %vm813, %v718, 0
    %v929 = vsel %vm813, %v719, 0
    %v932 = vsel %vm813, %v720, 0
    %v935 = vsel %vm813, %v721, 0
    %v938 = vsel %vm813, %v722, 0
    %v941 = vsel %vm813, %v723, 0
    %v944 = vsel %vm813, %v724, 0
    %v947 = vsel %vm813, %v725, 0
    %v950 = vsel %vm813, %v726, 0
    %v953 = vsel %vm813, %v727, 0
    %v956 = vsel %vm813, %v728, 0
    %v959 = vsel %vm813, %v729, 0
    %v962 = vsel %vm813, %v730, 0
    %v965 = vsel %vm813, %v731, 0
    %v968 = vsel %vm813, %v732, 0
    %v971 = vsel %vm813, %v733, 0
    %v974 = vsel %vm813, %v734, 0
    %v977 = vsel %vm813, %v735, 0
    %v980 = vsel %vm813, %v736, 0
    %v983 = vsel %vm813, %v737, 0
    %v986 = vsel %vm813, %v738, 0
    %v989 = vsel %vm813, %v739, 0
    %v992 = vsel %vm813, %v740, 0
    %v995 = vsel %vm813, %v741, 0
    %v998 = vsel %vm813, %v742, 0
    %v1001 = vsel %vm813, %v743, 0
    %v1004 = vsel %vm813, %v744, 0
    %1006 = vmatpush.bf16.msra.mxu0 0
    %1007 = vmatpush.bf16.msra.mxu0 0
    %1008 = vmatpush.bf16.msra.mxu0 0
    %1009 = vmatpush.bf16.msra.mxu0 0
    %1010 = vmatpush.bf16.msra.mxu0 0
    %1011 = vmatpush.bf16.msra.mxu0 0
    %1012 = vmatpush.bf16.msra.mxu0 %v815
    %1013 = vmatpush.bf16.msra.mxu0 %v617
    %1014 = vmatmul.bf16.gmra.mxu0 %v811
    %v1015 = vpop.f32.mrf.mxu0
    %v1016 = vadd.f32 %v201, %v1015
    %v1017 = vpop.f32.mrf.mxu0
    %1018 = vdwg.mxu0
    %1019 = vmatpush.bf16.msra.mxu0 0
    %1020 = vmatpush.bf16.msra.mxu0 0
    %1021 = vmatpush.bf16.msra.mxu0 0
    %1022 = vmatpush.bf16.msra.mxu0 0
    %1023 = vmatpush.bf16.msra.mxu0 0
    %1024 = vmatpush.bf16.msra.mxu0 0
    %1025 = vmatpush.bf16.msra.mxu0 %v818
    %1026 = vmatpush.bf16.msra.mxu0 %v618
    %1027 = vmatmul.bf16.gmra.mxu0 %v811
    %v1028 = vpop.f32.mrf.mxu0
    %v1029 = vadd.f32 %v202, %v1028
    %v1030 = vpop.f32.mrf.mxu0
    %1031 = vdwg.mxu0
    %1032 = vmatpush.bf16.msra.mxu0 0
    %1033 = vmatpush.bf16.msra.mxu0 0
    %1034 = vmatpush.bf16.msra.mxu0 0
    %1035 = vmatpush.bf16.msra.mxu0 0
    %1036 = vmatpush.bf16.msra.mxu0 0
    %1037 = vmatpush.bf16.msra.mxu0 0
    %1038 = vmatpush.bf16.msra.mxu0 %v821
    %1039 = vmatpush.bf16.msra.mxu0 %v619
    %1040 = vmatmul.bf16.gmra.mxu0 %v811
    %v1041 = vpop.f32.mrf.mxu0
    %v1042 = vadd.f32 %v203, %v1041
    %v1043 = vpop.f32.mrf.mxu0
    %1044 = vdwg.mxu0
    %1045 = vmatpush.bf16.msra.mxu0 0
    %1046 = vmatpush.bf16.msra.mxu0 0
    %1047 = vmatpush.bf16.msra.mxu0 0
    %1048 = vmatpush.bf16.msra.mxu0 0
    %1049 = vmatpush.bf16.msra.mxu0 0
    %1050 = vmatpush.bf16.msra.mxu0 0
    %1051 = vmatpush.bf16.msra.mxu0 %v824
    %1052 = vmatpush.bf16.msra.mxu0 %v620
    %1053 = vmatmul.bf16.gmra.mxu0 %v811
    %v1054 = vpop.f32.mrf.mxu0
    %v1055 = vadd.f32 %v204, %v1054
    %v1056 = vpop.f32.mrf.mxu0
    %1057 = vdwg.mxu0
    %1058 = vmatpush.bf16.msra.mxu0 0
    %1059 = vmatpush.bf16.msra.mxu0 0
    %1060 = vmatpush.bf16.msra.mxu0 0
    %1061 = vmatpush.bf16.msra.mxu0 0
    %1062 = vmatpush.bf16.msra.mxu0 0
    %1063 = vmatpush.bf16.msra.mxu0 0
    %1064 = vmatpush.bf16.msra.mxu0 %v827
    %1065 = vmatpush.bf16.msra.mxu0 %v621
    %1066 = vmatmul.bf16.gmra.mxu0 %v811
    %v1067 = vpop.f32.mrf.mxu0
    %v1068 = vadd.f32 %v205, %v1067
    %v1069 = vpop.f32.mrf.mxu0
    %1070 = vdwg.mxu0
    %1071 = vmatpush.bf16.msra.mxu0 0
    %1072 = vmatpush.bf16.msra.mxu0 0
    %1073 = vmatpush.bf16.msra.mxu0 0
    %1074 = vmatpush.bf16.msra.mxu0 0
    %1075 = vmatpush.bf16.msra.mxu0 0
    %1076 = vmatpush.bf16.msra.mxu0 0
    %1077 = vmatpush.bf16.msra.mxu0 %v830
    %1078 = vmatpush.bf16.msra.mxu0 %v622
    %1079 = vmatmul.bf16.gmra.mxu0 %v811
    %v1080 = vpop.f32.mrf.mxu0
    %v1081 = vadd.f32 %v206, %v1080
    %v1082 = vpop.f32.mrf.mxu0
    %1083 = vdwg.mxu0
    %1084 = vmatpush.bf16.msra.mxu0 0
    %1085 = vmatpush.bf16.msra.mxu0 0
    %1086 = vmatpush.bf16.msra.mxu0 0
    %1087 = vmatpush.bf16.msra.mxu0 0
    %1088 = vmatpush.bf16.msra.mxu0 0
    %1089 = vmatpush.bf16.msra.mxu0 0
    %1090 = vmatpush.bf16.msra.mxu0 %v833
    %1091 = vmatpush.bf16.msra.mxu0 %v623
    %1092 = vmatmul.bf16.gmra.mxu0 %v811
    %v1093 = vpop.f32.mrf.mxu0
    %v1094 = vadd.f32 %v207, %v1093
    %v1095 = vpop.f32.mrf.mxu0
    %1096 = vdwg.mxu0
    %1097 = vmatpush.bf16.msra.mxu0 0
    %1098 = vmatpush.bf16.msra.mxu0 0
    %1099 = vmatpush.bf16.msra.mxu0 0
    %1100 = vmatpush.bf16.msra.mxu0 0
    %1101 = vmatpush.bf16.msra.mxu0 0
    %1102 = vmatpush.bf16.msra.mxu0 0
    %1103 = vmatpush.bf16.msra.mxu0 %v836
    %1104 = vmatpush.bf16.msra.mxu0 %v624
    %1105 = vmatmul.bf16.gmra.mxu0 %v811
    %v1106 = vpop.f32.mrf.mxu0
    %v1107 = vadd.f32 %v208, %v1106
    %v1108 = vpop.f32.mrf.mxu0
    %1109 = vdwg.mxu0
    %1110 = vmatpush.bf16.msra.mxu0 0
    %1111 = vmatpush.bf16.msra.mxu0 0
    %1112 = vmatpush.bf16.msra.mxu0 0
    %1113 = vmatpush.bf16.msra.mxu0 0
    %1114 = vmatpush.bf16.msra.mxu0 0
    %1115 = vmatpush.bf16.msra.mxu0 0
    %1116 = vmatpush.bf16.msra.mxu0 %v839
    %1117 = vmatpush.bf16.msra.mxu0 %v625
    %1118 = vmatmul.bf16.gmra.mxu0 %v811
    %v1119 = vpop.f32.mrf.mxu0
    %v1120 = vadd.f32 %v209, %v1119
    %v1121 = vpop.f32.mrf.mxu0
    %1122 = vdwg.mxu0
    %1123 = vmatpush.bf16.msra.mxu0 0
    %1124 = vmatpush.bf16.msra.mxu0 0
    %1125 = vmatpush.bf16.msra.mxu0 0
    %1126 = vmatpush.bf16.msra.mxu0 0
    %1127 = vmatpush.bf16.msra.mxu0 0
    %1128 = vmatpush.bf16.msra.mxu0 0
    %1129 = vmatpush.bf16.msra.mxu0 %v842
    %1130 = vmatpush.bf16.msra.mxu0 %v626
    %1131 = vmatmul.bf16.gmra.mxu0 %v811
    %v1132 = vpop.f32.mrf.mxu0
    %v1133 = vadd.f32 %v210, %v1132
    %v1134 = vpop.f32.mrf.mxu0
    %1135 = vdwg.mxu0
    %1136 = vmatpush.bf16.msra.mxu0 0
    %1137 = vmatpush.bf16.msra.mxu0 0
    %1138 = vmatpush.bf16.msra.mxu0 0
    %1139 = vmatpush.bf16.msra.mxu0 0
    %1140 = vmatpush.bf16.msra.mxu0 0
    %1141 = vmatpush.bf16.msra.mxu0 0
    %1142 = vmatpush.bf16.msra.mxu0 %v845
    %1143 = vmatpush.bf16.msra.mxu0 %v627
    %1144 = vmatmul.bf16.gmra.mxu0 %v811
    %v1145 = vpop.f32.mrf.mxu0
    %v1146 = vadd.f32 %v211, %v1145
    %v1147 = vpop.f32.mrf.mxu0
    %1148 = vdwg.mxu0
    %1149 = vmatpush.bf16.msra.mxu0 0
    %1150 = vmatpush.bf16.msra.mxu0 0
    %1151 = vmatpush.bf16.msra.mxu0 0
    %1152 = vmatpush.bf16.msra.mxu0 0
    %1153 = vmatpush.bf16.msra.mxu0 0
    %1154 = vmatpush.bf16.msra.mxu0 0
    %1155 = vmatpush.bf16.msra.mxu0 %v848
    %1156 = vmatpush.bf16.msra.mxu0 %v628
    %1157 = vmatmul.bf16.gmra.mxu0 %v811
    %v1158 = vpop.f32.mrf.mxu0
    %v1159 = vadd.f32 %v212, %v1158
    %v1160 = vpop.f32.mrf.mxu0
    %1161 = vdwg.mxu0
    %1162 = vmatpush.bf16.msra.mxu0 0
    %1163 = vmatpush.bf16.msra.mxu0 0
    %1164 = vmatpush.bf16.msra.mxu0 0
    %1165 = vmatpush.bf16.msra.mxu0 0
    %1166 = vmatpush.bf16.msra.mxu0 0
    %1167 = vmatpush.bf16.msra.mxu0 0
    %1168 = vmatpush.bf16.msra.mxu0 %v851
    %1169 = vmatpush.bf16.msra.mxu0 %v629
    %1170 = vmatmul.bf16.gmra.mxu0 %v811
    %v1171 = vpop.f32.mrf.mxu0
    %v1172 = vadd.f32 %v213, %v1171
    %v1173 = vpop.f32.mrf.mxu0
    %1174 = vdwg.mxu0
    %1175 = vmatpush.bf16.msra.mxu0 0
    %1176 = vmatpush.bf16.msra.mxu0 0
    %1177 = vmatpush.bf16.msra.mxu0 0
    %1178 = vmatpush.bf16.msra.mxu0 0
    %1179 = vmatpush.bf16.msra.mxu0 0
    %1180 = vmatpush.bf16.msra.mxu0 0
    %1181 = vmatpush.bf16.msra.mxu0 %v854
    %1182 = vmatpush.bf16.msra.mxu0 %v630
    %1183 = vmatmul.bf16.gmra.mxu0 %v811
    %v1184 = vpop.f32.mrf.mxu0
    %v1185 = vadd.f32 %v214, %v1184
    %v1186 = vpop.f32.mrf.mxu0
    %1187 = vdwg.mxu0
    %1188 = vmatpush.bf16.msra.mxu0 0
    %1189 = vmatpush.bf16.msra.mxu0 0
    %1190 = vmatpush.bf16.msra.mxu0 0
    %1191 = vmatpush.bf16.msra.mxu0 0
    %1192 = vmatpush.bf16.msra.mxu0 0
    %1193 = vmatpush.bf16.msra.mxu0 0
    %1194 = vmatpush.bf16.msra.mxu0 %v857
    %1195 = vmatpush.bf16.msra.mxu0 %v631
    %1196 = vmatmul.bf16.gmra.mxu0 %v811
    %v1197 = vpop.f32.mrf.mxu0
    %v1198 = vadd.f32 %v215, %v1197
    %v1199 = vpop.f32.mrf.mxu0
    %1200 = vdwg.mxu0
    %1201 = vmatpush.bf16.msra.mxu0 0
    %1202 = vmatpush.bf16.msra.mxu0 0
    %1203 = vmatpush.bf16.msra.mxu0 0
    %1204 = vmatpush.bf16.msra.mxu0 0
    %1205 = vmatpush.bf16.msra.mxu0 0
    %1206 = vmatpush.bf16.msra.mxu0 0
    %1207 = vmatpush.bf16.msra.mxu0 %v860
    %1208 = vmatpush.bf16.msra.mxu0 %v632
    %1209 = vmatmul.bf16.gmra.mxu0 %v811
    %v1210 = vpop.f32.mrf.mxu0
    %v1211 = vadd.f32 %v216, %v1210
    %v1212 = vpop.f32.mrf.mxu0
    %1213 = vdwg.mxu0
    %1214 = vmatpush.bf16.msra.mxu0 0
    %1215 = vmatpush.bf16.msra.mxu0 0
    %1216 = vmatpush.bf16.msra.mxu0 0
    %1217 = vmatpush.bf16.msra.mxu0 0
    %1218 = vmatpush.bf16.msra.mxu0 0
    %1219 = vmatpush.bf16.msra.mxu0 0
    %1220 = vmatpush.bf16.msra.mxu0 %v863
    %1221 = vmatpush.bf16.msra.mxu0 %v633
    %1222 = vmatmul.bf16.gmra.mxu0 %v811
    %v1223 = vpop.f32.mrf.mxu0
    %v1224 = vadd.f32 %v217, %v1223
    %v1225 = vpop.f32.mrf.mxu0
    %1226 = vdwg.mxu0
    %1227 = vmatpush.bf16.msra.mxu0 0
    %1228 = vmatpush.bf16.msra.mxu0 0
    %1229 = vmatpush.bf16.msra.mxu0 0
    %1230 = vmatpush.bf16.msra.mxu0 0
    %1231 = vmatpush.bf16.msra.mxu0 0
    %1232 = vmatpush.bf16.msra.mxu0 0
    %1233 = vmatpush.bf16.msra.mxu0 %v866
    %1234 = vmatpush.bf16.msra.mxu0 %v634
    %1235 = vmatmul.bf16.gmra.mxu0 %v811
    %v1236 = vpop.f32.mrf.mxu0
    %v1237 = vadd.f32 %v218, %v1236
    %v1238 = vpop.f32.mrf.mxu0
    %1239 = vdwg.mxu0
    %1240 = vmatpush.bf16.msra.mxu0 0
    %1241 = vmatpush.bf16.msra.mxu0 0
    %1242 = vmatpush.bf16.msra.mxu0 0
    %1243 = vmatpush.bf16.msra.mxu0 0
    %1244 = vmatpush.bf16.msra.mxu0 0
    %1245 = vmatpush.bf16.msra.mxu0 0
    %1246 = vmatpush.bf16.msra.mxu0 %v869
    %1247 = vmatpush.bf16.msra.mxu0 %v635
    %1248 = vmatmul.bf16.gmra.mxu0 %v811
    %v1249 = vpop.f32.mrf.mxu0
    %v1250 = vadd.f32 %v219, %v1249
    %v1251 = vpop.f32.mrf.mxu0
    %1252 = vdwg.mxu0
    %1253 = vmatpush.bf16.msra.mxu0 0
    %1254 = vmatpush.bf16.msra.mxu0 0
    %1255 = vmatpush.bf16.msra.mxu0 0
    %1256 = vmatpush.bf16.msra.mxu0 0
    %1257 = vmatpush.bf16.msra.mxu0 0
    %1258 = vmatpush.bf16.msra.mxu0 0
    %1259 = vmatpush.bf16.msra.mxu0 %v872
    %1260 = vmatpush.bf16.msra.mxu0 %v636
    %1261 = vmatmul.bf16.gmra.mxu0 %v811
    %v1262 = vpop.f32.mrf.mxu0
    %v1263 = vadd.f32 %v220, %v1262
    %v1264 = vpop.f32.mrf.mxu0
    %1265 = vdwg.mxu0
    %1266 = vmatpush.bf16.msra.mxu0 0
    %1267 = vmatpush.bf16.msra.mxu0 0
    %1268 = vmatpush.bf16.msra.mxu0 0
    %1269 = vmatpush.bf16.msra.mxu0 0
    %1270 = vmatpush.bf16.msra.mxu0 0
    %1271 = vmatpush.bf16.msra.mxu0 0
    %1272 = vmatpush.bf16.msra.mxu0 %v875
    %1273 = vmatpush.bf16.msra.mxu0 %v637
    %1274 = vmatmul.bf16.gmra.mxu0 %v811
    %v1275 = vpop.f32.mrf.mxu0
    %v1276 = vadd.f32 %v221, %v1275
    %v1277 = vpop.f32.mrf.mxu0
    %1278 = vdwg.mxu0
    %1279 = vmatpush.bf16.msra.mxu0 0
    %1280 = vmatpush.bf16.msra.mxu0 0
    %1281 = vmatpush.bf16.msra.mxu0 0
    %1282 = vmatpush.bf16.msra.mxu0 0
    %1283 = vmatpush.bf16.msra.mxu0 0
    %1284 = vmatpush.bf16.msra.mxu0 0
    %1285 = vmatpush.bf16.msra.mxu0 %v878
    %1286 = vmatpush.bf16.msra.mxu0 %v638
    %1287 = vmatmul.bf16.gmra.mxu0 %v811
    %v1288 = vpop.f32.mrf.mxu0
    %v1289 = vadd.f32 %v222, %v1288
    %v1290 = vpop.f32.mrf.mxu0
    %1291 = vdwg.mxu0
    %1292 = vmatpush.bf16.msra.mxu0 0
    %1293 = vmatpush.bf16.msra.mxu0 0
    %1294 = vmatpush.bf16.msra.mxu0 0
    %1295 = vmatpush.bf16.msra.mxu0 0
    %1296 = vmatpush.bf16.msra.mxu0 0
    %1297 = vmatpush.bf16.msra.mxu0 0
    %1298 = vmatpush.bf16.msra.mxu0 %v881
    %1299 = vmatpush.bf16.msra.mxu0 %v639
    %1300 = vmatmul.bf16.gmra.mxu0 %v811
    %v1301 = vpop.f32.mrf.mxu0
    %v1302 = vadd.f32 %v223, %v1301
    %v1303 = vpop.f32.mrf.mxu0
    %1304 = vdwg.mxu0
    %1305 = vmatpush.bf16.msra.mxu0 0
    %1306 = vmatpush.bf16.msra.mxu0 0
    %1307 = vmatpush.bf16.msra.mxu0 0
    %1308 = vmatpush.bf16.msra.mxu0 0
    %1309 = vmatpush.bf16.msra.mxu0 0
    %1310 = vmatpush.bf16.msra.mxu0 0
    %1311 = vmatpush.bf16.msra.mxu0 %v884
    %1312 = vmatpush.bf16.msra.mxu0 %v640
    %1313 = vmatmul.bf16.gmra.mxu0 %v811
    %v1314 = vpop.f32.mrf.mxu0
    %v1315 = vadd.f32 %v224, %v1314
    %v1316 = vpop.f32.mrf.mxu0
    %1317 = vdwg.mxu0
    %1318 = vmatpush.bf16.msra.mxu0 0
    %1319 = vmatpush.bf16.msra.mxu0 0
    %1320 = vmatpush.bf16.msra.mxu0 0
    %1321 = vmatpush.bf16.msra.mxu0 0
    %1322 = vmatpush.bf16.msra.mxu0 0
    %1323 = vmatpush.bf16.msra.mxu0 0
    %1324 = vmatpush.bf16.msra.mxu0 %v887
    %1325 = vmatpush.bf16.msra.mxu0 %v641
    %1326 = vmatmul.bf16.gmra.mxu0 %v811
    %v1327 = vpop.f32.mrf.mxu0
    %v1328 = vadd.f32 %v225, %v1327
    %v1329 = vpop.f32.mrf.mxu0
    %1330 = vdwg.mxu0
    %1331 = vmatpush.bf16.msra.mxu0 0
    %1332 = vmatpush.bf16.msra.mxu0 0
    %1333 = vmatpush.bf16.msra.mxu0 0
    %1334 = vmatpush.bf16.msra.mxu0 0
    %1335 = vmatpush.bf16.msra.mxu0 0
    %1336 = vmatpush.bf16.msra.mxu0 0
    %1337 = vmatpush.bf16.msra.mxu0 %v890
    %1338 = vmatpush.bf16.msra.mxu0 %v642
    %1339 = vmatmul.bf16.gmra.mxu0 %v811
    %v1340 = vpop.f32.mrf.mxu0
    %v1341 = vadd.f32 %v226, %v1340
    %v1342 = vpop.f32.mrf.mxu0
    %1343 = vdwg.mxu0
    %1344 = vmatpush.bf16.msra.mxu0 0
    %1345 = vmatpush.bf16.msra.mxu0 0
    %1346 = vmatpush.bf16.msra.mxu0 0
    %1347 = vmatpush.bf16.msra.mxu0 0
    %1348 = vmatpush.bf16.msra.mxu0 0
    %1349 = vmatpush.bf16.msra.mxu0 0
    %1350 = vmatpush.bf16.msra.mxu0 %v893
    %1351 = vmatpush.bf16.msra.mxu0 %v643
    %1352 = vmatmul.bf16.gmra.mxu0 %v811
    %v1353 = vpop.f32.mrf.mxu0
    %v1354 = vadd.f32 %v227, %v1353
    %v1355 = vpop.f32.mrf.mxu0
    %1356 = vdwg.mxu0
    %1357 = vmatpush.bf16.msra.mxu0 0
    %1358 = vmatpush.bf16.msra.mxu0 0
    %1359 = vmatpush.bf16.msra.mxu0 0
    %1360 = vmatpush.bf16.msra.mxu0 0
    %1361 = vmatpush.bf16.msra.mxu0 0
    %1362 = vmatpush.bf16.msra.mxu0 0
    %1363 = vmatpush.bf16.msra.mxu0 %v896
    %1364 = vmatpush.bf16.msra.mxu0 %v644
    %1365 = vmatmul.bf16.gmra.mxu0 %v811
    %v1366 = vpop.f32.mrf.mxu0
    %v1367 = vadd.f32 %v228, %v1366
    %v1368 = vpop.f32.mrf.mxu0
    %1369 = vdwg.mxu0
    %1370 = vmatpush.bf16.msra.mxu0 0
    %1371 = vmatpush.bf16.msra.mxu0 0
    %1372 = vmatpush.bf16.msra.mxu0 0
    %1373 = vmatpush.bf16.msra.mxu0 0
    %1374 = vmatpush.bf16.msra.mxu0 0
    %1375 = vmatpush.bf16.msra.mxu0 0
    %1376 = vmatpush.bf16.msra.mxu0 %v899
    %1377 = vmatpush.bf16.msra.mxu0 %v645
    %1378 = vmatmul.bf16.gmra.mxu0 %v811
    %v1379 = vpop.f32.mrf.mxu0
    %v1380 = vadd.f32 %v229, %v1379
    %v1381 = vpop.f32.mrf.mxu0
    %1382 = vdwg.mxu0
    %1383 = vmatpush.bf16.msra.mxu0 0
    %1384 = vmatpush.bf16.msra.mxu0 0
    %1385 = vmatpush.bf16.msra.mxu0 0
    %1386 = vmatpush.bf16.msra.mxu0 0
    %1387 = vmatpush.bf16.msra.mxu0 0
    %1388 = vmatpush.bf16.msra.mxu0 0
    %1389 = vmatpush.bf16.msra.mxu0 %v902
    %1390 = vmatpush.bf16.msra.mxu0 %v646
    %1391 = vmatmul.bf16.gmra.mxu0 %v811
    %v1392 = vpop.f32.mrf.mxu0
    %v1393 = vadd.f32 %v230, %v1392
    %v1394 = vpop.f32.mrf.mxu0
    %1395 = vdwg.mxu0
    %1396 = vmatpush.bf16.msra.mxu0 0
    %1397 = vmatpush.bf16.msra.mxu0 0
    %1398 = vmatpush.bf16.msra.mxu0 0
    %1399 = vmatpush.bf16.msra.mxu0 0
    %1400 = vmatpush.bf16.msra.mxu0 0
    %1401 = vmatpush.bf16.msra.mxu0 0
    %1402 = vmatpush.bf16.msra.mxu0 %v905
    %1403 = vmatpush.bf16.msra.mxu0 %v647
    %1404 = vmatmul.bf16.gmra.mxu0 %v811
    %v1405 = vpop.f32.mrf.mxu0
    %v1406 = vadd.f32 %v231, %v1405
    %v1407 = vpop.f32.mrf.mxu0
    %1408 = vdwg.mxu0
    %1409 = vmatpush.bf16.msra.mxu0 0
    %1410 = vmatpush.bf16.msra.mxu0 0
    %1411 = vmatpush.bf16.msra.mxu0 0
    %1412 = vmatpush.bf16.msra.mxu0 0
    %1413 = vmatpush.bf16.msra.mxu0 0
    %1414 = vmatpush.bf16.msra.mxu0 0
    %1415 = vmatpush.bf16.msra.mxu0 %v908
    %1416 = vmatpush.bf16.msra.mxu0 %v648
    %1417 = vmatmul.bf16.gmra.mxu0 %v811
    %v1418 = vpop.f32.mrf.mxu0
    %v1419 = vadd.f32 %v232, %v1418
    %v1420 = vpop.f32.mrf.mxu0
    %1421 = vdwg.mxu0
    %1422 = vmatpush.bf16.msra.mxu0 0
    %1423 = vmatpush.bf16.msra.mxu0 0
    %1424 = vmatpush.bf16.msra.mxu0 0
    %1425 = vmatpush.bf16.msra.mxu0 0
    %1426 = vmatpush.bf16.msra.mxu0 0
    %1427 = vmatpush.bf16.msra.mxu0 0
    %1428 = vmatpush.bf16.msra.mxu0 %v911
    %1429 = vmatpush.bf16.msra.mxu0 %v649
    %1430 = vmatmul.bf16.gmra.mxu0 %v811
    %v1431 = vpop.f32.mrf.mxu0
    %v1432 = vadd.f32 %v233, %v1431
    %v1433 = vpop.f32.mrf.mxu0
    %1434 = vdwg.mxu0
    %1435 = vmatpush.bf16.msra.mxu0 0
    %1436 = vmatpush.bf16.msra.mxu0 0
    %1437 = vmatpush.bf16.msra.mxu0 0
    %1438 = vmatpush.bf16.msra.mxu0 0
    %1439 = vmatpush.bf16.msra.mxu0 0
    %1440 = vmatpush.bf16.msra.mxu0 0
    %1441 = vmatpush.bf16.msra.mxu0 %v914
    %1442 = vmatpush.bf16.msra.mxu0 %v650
    %1443 = vmatmul.bf16.gmra.mxu0 %v811
    %v1444 = vpop.f32.mrf.mxu0
    %v1445 = vadd.f32 %v234, %v1444
    %v1446 = vpop.f32.mrf.mxu0
    %1447 = vdwg.mxu0
    %1448 = vmatpush.bf16.msra.mxu0 0
    %1449 = vmatpush.bf16.msra.mxu0 0
    %1450 = vmatpush.bf16.msra.mxu0 0
    %1451 = vmatpush.bf16.msra.mxu0 0
    %1452 = vmatpush.bf16.msra.mxu0 0
    %1453 = vmatpush.bf16.msra.mxu0 0
    %1454 = vmatpush.bf16.msra.mxu0 %v917
    %1455 = vmatpush.bf16.msra.mxu0 %v651
    %1456 = vmatmul.bf16.gmra.mxu0 %v811
    %v1457 = vpop.f32.mrf.mxu0
    %v1458 = vadd.f32 %v235, %v1457
    %v1459 = vpop.f32.mrf.mxu0
    %1460 = vdwg.mxu0
    %1461 = vmatpush.bf16.msra.mxu0 0
    %1462 = vmatpush.bf16.msra.mxu0 0
    %1463 = vmatpush.bf16.msra.mxu0 0
    %1464 = vmatpush.bf16.msra.mxu0 0
    %1465 = vmatpush.bf16.msra.mxu0 0
    %1466 = vmatpush.bf16.msra.mxu0 0
    %1467 = vmatpush.bf16.msra.mxu0 %v920
    %1468 = vmatpush.bf16.msra.mxu0 %v652
    %1469 = vmatmul.bf16.gmra.mxu0 %v811
    %v1470 = vpop.f32.mrf.mxu0
    %v1471 = vadd.f32 %v236, %v1470
    %v1472 = vpop.f32.mrf.mxu0
    %1473 = vdwg.mxu0
    %1474 = vmatpush.bf16.msra.mxu0 0
    %1475 = vmatpush.bf16.msra.mxu0 0
    %1476 = vmatpush.bf16.msra.mxu0 0
    %1477 = vmatpush.bf16.msra.mxu0 0
    %1478 = vmatpush.bf16.msra.mxu0 0
    %1479 = vmatpush.bf16.msra.mxu0 0
    %1480 = vmatpush.bf16.msra.mxu0 %v923
    %1481 = vmatpush.bf16.msra.mxu0 %v653
    %1482 = vmatmul.bf16.gmra.mxu0 %v811
    %v1483 = vpop.f32.mrf.mxu0
    %v1484 = vadd.f32 %v237, %v1483
    %v1485 = vpop.f32.mrf.mxu0
    %1486 = vdwg.mxu0
    %1487 = vmatpush.bf16.msra.mxu0 0
    %1488 = vmatpush.bf16.msra.mxu0 0
    %1489 = vmatpush.bf16.msra.mxu0 0
    %1490 = vmatpush.bf16.msra.mxu0 0
    %1491 = vmatpush.bf16.msra.mxu0 0
    %1492 = vmatpush.bf16.msra.mxu0 0
    %1493 = vmatpush.bf16.msra.mxu0 %v926
    %1494 = vmatpush.bf16.msra.mxu0 %v654
    %1495 = vmatmul.bf16.gmra.mxu0 %v811
    %v1496 = vpop.f32.mrf.mxu0
    %v1497 = vadd.f32 %v238, %v1496
    %v1498 = vpop.f32.mrf.mxu0
    %1499 = vdwg.mxu0
    %1500 = vmatpush.bf16.msra.mxu0 0
    %1501 = vmatpush.bf16.msra.mxu0 0
    %1502 = vmatpush.bf16.msra.mxu0 0
    %1503 = vmatpush.bf16.msra.mxu0 0
    %1504 = vmatpush.bf16.msra.mxu0 0
    %1505 = vmatpush.bf16.msra.mxu0 0
    %1506 = vmatpush.bf16.msra.mxu0 %v929
    %1507 = vmatpush.bf16.msra.mxu0 %v655
    %1508 = vmatmul.bf16.gmra.mxu0 %v811
    %v1509 = vpop.f32.mrf.mxu0
    %v1510 = vadd.f32 %v239, %v1509
    %v1511 = vpop.f32.mrf.mxu0
    %1512 = vdwg.mxu0
    %1513 = vmatpush.bf16.msra.mxu0 0
    %1514 = vmatpush.bf16.msra.mxu0 0
    %1515 = vmatpush.bf16.msra.mxu0 0
    %1516 = vmatpush.bf16.msra.mxu0 0
    %1517 = vmatpush.bf16.msra.mxu0 0
    %1518 = vmatpush.bf16.msra.mxu0 0
    %1519 = vmatpush.bf16.msra.mxu0 %v932
    %1520 = vmatpush.bf16.msra.mxu0 %v656
    %1521 = vmatmul.bf16.gmra.mxu0 %v811
    %v1522 = vpop.f32.mrf.mxu0
    %v1523 = vadd.f32 %v240, %v1522
    %v1524 = vpop.f32.mrf.mxu0
    %1525 = vdwg.mxu0
    %1526 = vmatpush.bf16.msra.mxu0 0
    %1527 = vmatpush.bf16.msra.mxu0 0
    %1528 = vmatpush.bf16.msra.mxu0 0
    %1529 = vmatpush.bf16.msra.mxu0 0
    %1530 = vmatpush.bf16.msra.mxu0 0
    %1531 = vmatpush.bf16.msra.mxu0 0
    %1532 = vmatpush.bf16.msra.mxu0 %v935
    %1533 = vmatpush.bf16.msra.mxu0 %v657
    %1534 = vmatmul.bf16.gmra.mxu0 %v811
    %v1535 = vpop.f32.mrf.mxu0
    %v1536 = vadd.f32 %v241, %v1535
    %v1537 = vpop.f32.mrf.mxu0
    %1538 = vdwg.mxu0
    %1539 = vmatpush.bf16.msra.mxu0 0
    %1540 = vmatpush.bf16.msra.mxu0 0
    %1541 = vmatpush.bf16.msra.mxu0 0
    %1542 = vmatpush.bf16.msra.mxu0 0
    %1543 = vmatpush.bf16.msra.mxu0 0
    %1544 = vmatpush.bf16.msra.mxu0 0
    %1545 = vmatpush.bf16.msra.mxu0 %v938
    %1546 = vmatpush.bf16.msra.mxu0 %v658
    %1547 = vmatmul.bf16.gmra.mxu0 %v811
    %v1548 = vpop.f32.mrf.mxu0
    %v1549 = vadd.f32 %v242, %v1548
    %v1550 = vpop.f32.mrf.mxu0
    %1551 = vdwg.mxu0
    %1552 = vmatpush.bf16.msra.mxu0 0
    %1553 = vmatpush.bf16.msra.mxu0 0
    %1554 = vmatpush.bf16.msra.mxu0 0
    %1555 = vmatpush.bf16.msra.mxu0 0
    %1556 = vmatpush.bf16.msra.mxu0 0
    %1557 = vmatpush.bf16.msra.mxu0 0
    %1558 = vmatpush.bf16.msra.mxu0 %v941
    %1559 = vmatpush.bf16.msra.mxu0 %v659
    %1560 = vmatmul.bf16.gmra.mxu0 %v811
    %v1561 = vpop.f32.mrf.mxu0
    %v1562 = vadd.f32 %v243, %v1561
    %v1563 = vpop.f32.mrf.mxu0
    %1564 = vdwg.mxu0
    %1565 = vmatpush.bf16.msra.mxu0 0
    %1566 = vmatpush.bf16.msra.mxu0 0
    %1567 = vmatpush.bf16.msra.mxu0 0
    %1568 = vmatpush.bf16.msra.mxu0 0
    %1569 = vmatpush.bf16.msra.mxu0 0
    %1570 = vmatpush.bf16.msra.mxu0 0
    %1571 = vmatpush.bf16.msra.mxu0 %v944
    %1572 = vmatpush.bf16.msra.mxu0 %v660
    %1573 = vmatmul.bf16.gmra.mxu0 %v811
    %v1574 = vpop.f32.mrf.mxu0
    %v1575 = vadd.f32 %v244, %v1574
    %v1576 = vpop.f32.mrf.mxu0
    %1577 = vdwg.mxu0
    %1578 = vmatpush.bf16.msra.mxu0 0
    %1579 = vmatpush.bf16.msra.mxu0 0
    %1580 = vmatpush.bf16.msra.mxu0 0
    %1581 = vmatpush.bf16.msra.mxu0 0
    %1582 = vmatpush.bf16.msra.mxu0 0
    %1583 = vmatpush.bf16.msra.mxu0 0
    %1584 = vmatpush.bf16.msra.mxu0 %v947
    %1585 = vmatpush.bf16.msra.mxu0 %v661
    %1586 = vmatmul.bf16.gmra.mxu0 %v811
    %v1587 = vpop.f32.mrf.mxu0
    %v1588 = vadd.f32 %v245, %v1587
    %v1589 = vpop.f32.mrf.mxu0
    %1590 = vdwg.mxu0
    %1591 = vmatpush.bf16.msra.mxu0 0
    %1592 = vmatpush.bf16.msra.mxu0 0
    %1593 = vmatpush.bf16.msra.mxu0 0
    %1594 = vmatpush.bf16.msra.mxu0 0
    %1595 = vmatpush.bf16.msra.mxu0 0
    %1596 = vmatpush.bf16.msra.mxu0 0
    %1597 = vmatpush.bf16.msra.mxu0 %v950
    %1598 = vmatpush.bf16.msra.mxu0 %v662
    %1599 = vmatmul.bf16.gmra.mxu0 %v811
    %v1600 = vpop.f32.mrf.mxu0
    %v1601 = vadd.f32 %v246, %v1600
    %v1602 = vpop.f32.mrf.mxu0
    %1603 = vdwg.mxu0
    %1604 = vmatpush.bf16.msra.mxu0 0
    %1605 = vmatpush.bf16.msra.mxu0 0
    %1606 = vmatpush.bf16.msra.mxu0 0
    %1607 = vmatpush.bf16.msra.mxu0 0
    %1608 = vmatpush.bf16.msra.mxu0 0
    %1609 = vmatpush.bf16.msra.mxu0 0
    %1610 = vmatpush.bf16.msra.mxu0 %v953
    %1611 = vmatpush.bf16.msra.mxu0 %v663
    %1612 = vmatmul.bf16.gmra.mxu0 %v811
    %v1613 = vpop.f32.mrf.mxu0
    %v1614 = vadd.f32 %v247, %v1613
    %v1615 = vpop.f32.mrf.mxu0
    %1616 = vdwg.mxu0
    %1617 = vmatpush.bf16.msra.mxu0 0
    %1618 = vmatpush.bf16.msra.mxu0 0
    %1619 = vmatpush.bf16.msra.mxu0 0
    %1620 = vmatpush.bf16.msra.mxu0 0
    %1621 = vmatpush.bf16.msra.mxu0 0
    %1622 = vmatpush.bf16.msra.mxu0 0
    %1623 = vmatpush.bf16.msra.mxu0 %v956
    %1624 = vmatpush.bf16.msra.mxu0 %v664
    %1625 = vmatmul.bf16.gmra.mxu0 %v811
    %v1626 = vpop.f32.mrf.mxu0
    %v1627 = vadd.f32 %v248, %v1626
    %v1628 = vpop.f32.mrf.mxu0
    %1629 = vdwg.mxu0
    %1630 = vmatpush.bf16.msra.mxu0 0
    %1631 = vmatpush.bf16.msra.mxu0 0
    %1632 = vmatpush.bf16.msra.mxu0 0
    %1633 = vmatpush.bf16.msra.mxu0 0
    %1634 = vmatpush.bf16.msra.mxu0 0
    %1635 = vmatpush.bf16.msra.mxu0 0
    %1636 = vmatpush.bf16.msra.mxu0 %v959
    %1637 = vmatpush.bf16.msra.mxu0 %v665
    %1638 = vmatmul.bf16.gmra.mxu0 %v811
    %v1639 = vpop.f32.mrf.mxu0
    %v1640 = vadd.f32 %v249, %v1639
    %v1641 = vpop.f32.mrf.mxu0
    %1642 = vdwg.mxu0
    %1643 = vmatpush.bf16.msra.mxu0 0
    %1644 = vmatpush.bf16.msra.mxu0 0
    %1645 = vmatpush.bf16.msra.mxu0 0
    %1646 = vmatpush.bf16.msra.mxu0 0
    %1647 = vmatpush.bf16.msra.mxu0 0
    %1648 = vmatpush.bf16.msra.mxu0 0
    %1649 = vmatpush.bf16.msra.mxu0 %v962
    %1650 = vmatpush.bf16.msra.mxu0 %v666
    %1651 = vmatmul.bf16.gmra.mxu0 %v811
    %v1652 = vpop.f32.mrf.mxu0
    %v1653 = vadd.f32 %v250, %v1652
    %v1654 = vpop.f32.mrf.mxu0
    %1655 = vdwg.mxu0
    %1656 = vmatpush.bf16.msra.mxu0 0
    %1657 = vmatpush.bf16.msra.mxu0 0
    %1658 = vmatpush.bf16.msra.mxu0 0
    %1659 = vmatpush.bf16.msra.mxu0 0
    %1660 = vmatpush.bf16.msra.mxu0 0
    %1661 = vmatpush.bf16.msra.mxu0 0
    %1662 = vmatpush.bf16.msra.mxu0 %v965
    %1663 = vmatpush.bf16.msra.mxu0 %v667
    %1664 = vmatmul.bf16.gmra.mxu0 %v811
    %v1665 = vpop.f32.mrf.mxu0
    %v1666 = vadd.f32 %v251, %v1665
    %v1667 = vpop.f32.mrf.mxu0
    %1668 = vdwg.mxu0
    %1669 = vmatpush.bf16.msra.mxu0 0
    %1670 = vmatpush.bf16.msra.mxu0 0
    %1671 = vmatpush.bf16.msra.mxu0 0
    %1672 = vmatpush.bf16.msra.mxu0 0
    %1673 = vmatpush.bf16.msra.mxu0 0
    %1674 = vmatpush.bf16.msra.mxu0 0
    %1675 = vmatpush.bf16.msra.mxu0 %v968
    %1676 = vmatpush.bf16.msra.mxu0 %v668
    %1677 = vmatmul.bf16.gmra.mxu0 %v811
    %v1678 = vpop.f32.mrf.mxu0
    %v1679 = vadd.f32 %v252, %v1678
    %v1680 = vpop.f32.mrf.mxu0
    %1681 = vdwg.mxu0
    %1682 = vmatpush.bf16.msra.mxu0 0
    %1683 = vmatpush.bf16.msra.mxu0 0
    %1684 = vmatpush.bf16.msra.mxu0 0
    %1685 = vmatpush.bf16.msra.mxu0 0
    %1686 = vmatpush.bf16.msra.mxu0 0
    %1687 = vmatpush.bf16.msra.mxu0 0
    %1688 = vmatpush.bf16.msra.mxu0 %v971
    %1689 = vmatpush.bf16.msra.mxu0 %v669
    %1690 = vmatmul.bf16.gmra.mxu0 %v811
    %v1691 = vpop.f32.mrf.mxu0
    %v1692 = vadd.f32 %v253, %v1691
    %v1693 = vpop.f32.mrf.mxu0
    %1694 = vdwg.mxu0
    %1695 = vmatpush.bf16.msra.mxu0 0
    %1696 = vmatpush.bf16.msra.mxu0 0
    %1697 = vmatpush.bf16.msra.mxu0 0
    %1698 = vmatpush.bf16.msra.mxu0 0
    %1699 = vmatpush.bf16.msra.mxu0 0
    %1700 = vmatpush.bf16.msra.mxu0 0
    %1701 = vmatpush.bf16.msra.mxu0 %v974
    %1702 = vmatpush.bf16.msra.mxu0 %v670
    %1703 = vmatmul.bf16.gmra.mxu0 %v811
    %v1704 = vpop.f32.mrf.mxu0
    %v1705 = vadd.f32 %v254, %v1704
    %v1706 = vpop.f32.mrf.mxu0
    %1707 = vdwg.mxu0
    %1708 = vmatpush.bf16.msra.mxu0 0
    %1709 = vmatpush.bf16.msra.mxu0 0
    %1710 = vmatpush.bf16.msra.mxu0 0
    %1711 = vmatpush.bf16.msra.mxu0 0
    %1712 = vmatpush.bf16.msra.mxu0 0
    %1713 = vmatpush.bf16.msra.mxu0 0
    %1714 = vmatpush.bf16.msra.mxu0 %v977
    %1715 = vmatpush.bf16.msra.mxu0 %v671
    %1716 = vmatmul.bf16.gmra.mxu0 %v811
    %v1717 = vpop.f32.mrf.mxu0
    %v1718 = vadd.f32 %v255, %v1717
    %v1719 = vpop.f32.mrf.mxu0
    %1720 = vdwg.mxu0
    %1721 = vmatpush.bf16.msra.mxu0 0
    %1722 = vmatpush.bf16.msra.mxu0 0
    %1723 = vmatpush.bf16.msra.mxu0 0
    %1724 = vmatpush.bf16.msra.mxu0 0
    %1725 = vmatpush.bf16.msra.mxu0 0
    %1726 = vmatpush.bf16.msra.mxu0 0
    %1727 = vmatpush.bf16.msra.mxu0 %v980
    %1728 = vmatpush.bf16.msra.mxu0 %v672
    %1729 = vmatmul.bf16.gmra.mxu0 %v811
    %v1730 = vpop.f32.mrf.mxu0
    %v1731 = vadd.f32 %v256, %v1730
    %v1732 = vpop.f32.mrf.mxu0
    %1733 = vdwg.mxu0
    %1734 = vmatpush.bf16.msra.mxu0 0
    %1735 = vmatpush.bf16.msra.mxu0 0
    %1736 = vmatpush.bf16.msra.mxu0 0
    %1737 = vmatpush.bf16.msra.mxu0 0
    %1738 = vmatpush.bf16.msra.mxu0 0
    %1739 = vmatpush.bf16.msra.mxu0 0
    %1740 = vmatpush.bf16.msra.mxu0 %v983
    %1741 = vmatpush.bf16.msra.mxu0 %v673
    %1742 = vmatmul.bf16.gmra.mxu0 %v811
    %v1743 = vpop.f32.mrf.mxu0
    %v1744 = vadd.f32 %v257, %v1743
    %v1745 = vpop.f32.mrf.mxu0
    %1746 = vdwg.mxu0
    %1747 = vmatpush.bf16.msra.mxu0 0
    %1748 = vmatpush.bf16.msra.mxu0 0
    %1749 = vmatpush.bf16.msra.mxu0 0
    %1750 = vmatpush.bf16.msra.mxu0 0
    %1751 = vmatpush.bf16.msra.mxu0 0
    %1752 = vmatpush.bf16.msra.mxu0 0
    %1753 = vmatpush.bf16.msra.mxu0 %v986
    %1754 = vmatpush.bf16.msra.mxu0 %v674
    %1755 = vmatmul.bf16.gmra.mxu0 %v811
    %v1756 = vpop.f32.mrf.mxu0
    %v1757 = vadd.f32 %v258, %v1756
    %v1758 = vpop.f32.mrf.mxu0
    %1759 = vdwg.mxu0
    %1760 = vmatpush.bf16.msra.mxu0 0
    %1761 = vmatpush.bf16.msra.mxu0 0
    %1762 = vmatpush.bf16.msra.mxu0 0
    %1763 = vmatpush.bf16.msra.mxu0 0
    %1764 = vmatpush.bf16.msra.mxu0 0
    %1765 = vmatpush.bf16.msra.mxu0 0
    %1766 = vmatpush.bf16.msra.mxu0 %v989
    %1767 = vmatpush.bf16.msra.mxu0 %v675
    %1768 = vmatmul.bf16.gmra.mxu0 %v811
    %v1769 = vpop.f32.mrf.mxu0
    %v1770 = vadd.f32 %v259, %v1769
    %v1771 = vpop.f32.mrf.mxu0
    %1772 = vdwg.mxu0
    %1773 = vmatpush.bf16.msra.mxu0 0
    %1774 = vmatpush.bf16.msra.mxu0 0
    %1775 = vmatpush.bf16.msra.mxu0 0
    %1776 = vmatpush.bf16.msra.mxu0 0
    %1777 = vmatpush.bf16.msra.mxu0 0
    %1778 = vmatpush.bf16.msra.mxu0 0
    %1779 = vmatpush.bf16.msra.mxu0 %v992
    %1780 = vmatpush.bf16.msra.mxu0 %v676
    %1781 = vmatmul.bf16.gmra.mxu0 %v811
    %v1782 = vpop.f32.mrf.mxu0
    %v1783 = vadd.f32 %v260, %v1782
    %v1784 = vpop.f32.mrf.mxu0
    %1785 = vdwg.mxu0
    %1786 = vmatpush.bf16.msra.mxu0 0
    %1787 = vmatpush.bf16.msra.mxu0 0
    %1788 = vmatpush.bf16.msra.mxu0 0
    %1789 = vmatpush.bf16.msra.mxu0 0
    %1790 = vmatpush.bf16.msra.mxu0 0
    %1791 = vmatpush.bf16.msra.mxu0 0
    %1792 = vmatpush.bf16.msra.mxu0 %v995
    %1793 = vmatpush.bf16.msra.mxu0 %v677
    %1794 = vmatmul.bf16.gmra.mxu0 %v811
    %v1795 = vpop.f32.mrf.mxu0
    %v1796 = vadd.f32 %v261, %v1795
    %v1797 = vpop.f32.mrf.mxu0
    %1798 = vdwg.mxu0
    %1799 = vmatpush.bf16.msra.mxu0 0
    %1800 = vmatpush.bf16.msra.mxu0 0
    %1801 = vmatpush.bf16.msra.mxu0 0
    %1802 = vmatpush.bf16.msra.mxu0 0
    %1803 = vmatpush.bf16.msra.mxu0 0
    %1804 = vmatpush.bf16.msra.mxu0 0
    %1805 = vmatpush.bf16.msra.mxu0 %v998
    %1806 = vmatpush.bf16.msra.mxu0 %v678
    %1807 = vmatmul.bf16.gmra.mxu0 %v811
    %v1808 = vpop.f32.mrf.mxu0
    %v1809 = vadd.f32 %v262, %v1808
    %v1810 = vpop.f32.mrf.mxu0
    %1811 = vdwg.mxu0
    %1812 = vmatpush.bf16.msra.mxu0 0
    %1813 = vmatpush.bf16.msra.mxu0 0
    %1814 = vmatpush.bf16.msra.mxu0 0
    %1815 = vmatpush.bf16.msra.mxu0 0
    %1816 = vmatpush.bf16.msra.mxu0 0
    %1817 = vmatpush.bf16.msra.mxu0 0
    %1818 = vmatpush.bf16.msra.mxu0 %v1001
    %1819 = vmatpush.bf16.msra.mxu0 %v679
    %1820 = vmatmul.bf16.gmra.mxu0 %v811
    %v1821 = vpop.f32.mrf.mxu0
    %v1822 = vadd.f32 %v263, %v1821
    %v1823 = vpop.f32.mrf.mxu0
    %1824 = vdwg.mxu0
    %1825 = vmatpush.bf16.msra.mxu0 0
    %1826 = vmatpush.bf16.msra.mxu0 0
    %1827 = vmatpush.bf16.msra.mxu0 0
    %1828 = vmatpush.bf16.msra.mxu0 0
    %1829 = vmatpush.bf16.msra.mxu0 0
    %1830 = vmatpush.bf16.msra.mxu0 0
    %1831 = vmatpush.bf16.msra.mxu0 %v1004
    %1832 = vmatpush.bf16.msra.mxu0 %v680
    %1833 = vmatmul.bf16.gmra.mxu0 %v811
    %v1834 = vpop.f32.mrf.mxu0
    %v1835 = vadd.f32 %v264, %v1834
    %v1836 = vpop.f32.mrf.mxu0
    %1837 = vdwg.mxu0
    %v1838 = vmax.f32 %v1016, 0.0
    %v1839 = vmax.f32 %v1029, 0.0
    %v1840 = vmax.f32 %v1042, 0.0
    %v1841 = vmax.f32 %v1055, 0.0
    %v1842 = vmax.f32 %v1068, 0.0
    %v1843 = vmax.f32 %v1081, 0.0
    %v1844 = vmax.f32 %v1094, 0.0
    %v1845 = vmax.f32 %v1107, 0.0
    %v1846 = vmax.f32 %v1120, 0.0
    %v1847 = vmax.f32 %v1133, 0.0
    %v1848 = vmax.f32 %v1146, 0.0
    %v1849 = vmax.f32 %v1159, 0.0
    %v1850 = vmax.f32 %v1172, 0.0
    %v1851 = vmax.f32 %v1185, 0.0
    %v1852 = vmax.f32 %v1198, 0.0
    %v1853 = vmax.f32 %v1211, 0.0
    %v1854 = vmax.f32 %v1224, 0.0
    %v1855 = vmax.f32 %v1237, 0.0
    %v1856 = vmax.f32 %v1250, 0.0
    %v1857 = vmax.f32 %v1263, 0.0
    %v1858 = vmax.f32 %v1276, 0.0
    %v1859 = vmax.f32 %v1289, 0.0
    %v1860 = vmax.f32 %v1302, 0.0
    %v1861 = vmax.f32 %v1315, 0.0
    %v1862 = vmax.f32 %v1328, 0.0
    %v1863 = vmax.f32 %v1341, 0.0
    %v1864 = vmax.f32 %v1354, 0.0
    %v1865 = vmax.f32 %v1367, 0.0
    %v1866 = vmax.f32 %v1380, 0.0
    %v1867 = vmax.f32 %v1393, 0.0
    %v1868 = vmax.f32 %v1406, 0.0
    %v1869 = vmax.f32 %v1419, 0.0
    %v1870 = vmax.f32 %v1432, 0.0
    %v1871 = vmax.f32 %v1445, 0.0
    %v1872 = vmax.f32 %v1458, 0.0
    %v1873 = vmax.f32 %v1471, 0.0
    %v1874 = vmax.f32 %v1484, 0.0
    %v1875 = vmax.f32 %v1497, 0.0
    %v1876 = vmax.f32 %v1510, 0.0
    %v1877 = vmax.f32 %v1523, 0.0
    %v1878 = vmax.f32 %v1536, 0.0
    %v1879 = vmax.f32 %v1549, 0.0
    %v1880 = vmax.f32 %v1562, 0.0
    %v1881 = vmax.f32 %v1575, 0.0
    %v1882 = vmax.f32 %v1588, 0.0
    %v1883 = vmax.f32 %v1601, 0.0
    %v1884 = vmax.f32 %v1614, 0.0
    %v1885 = vmax.f32 %v1627, 0.0
    %v1886 = vmax.f32 %v1640, 0.0
    %v1887 = vmax.f32 %v1653, 0.0
    %v1888 = vmax.f32 %v1666, 0.0
    %v1889 = vmax.f32 %v1679, 0.0
    %v1890 = vmax.f32 %v1692, 0.0
    %v1891 = vmax.f32 %v1705, 0.0
    %v1892 = vmax.f32 %v1718, 0.0
    %v1893 = vmax.f32 %v1731, 0.0
    %v1894 = vmax.f32 %v1744, 0.0
    %v1895 = vmax.f32 %v1757, 0.0
    %v1896 = vmax.f32 %v1770, 0.0
    %v1897 = vmax.f32 %v1783, 0.0
    %v1898 = vmax.f32 %v1796, 0.0
    %v1899 = vmax.f32 %v1809, 0.0
    %v1900 = vmax.f32 %v1822, 0.0
    %v1901 = vmax.f32 %v1835, 0.0
    %v1966 = vrot.slane %v1839, 7
    %v1967 = vrot.slane %v1840, 6
    %v1968 = vrot.slane %v1841, 5
    %v1969 = vrot.slane %v1842, 4
    %v1970 = vrot.slane %v1843, 3
    %v1971 = vrot.slane %v1844, 2
    %v1972 = vrot.slane %v1845, 1
    %v1973 = vrot.slane %v1847, 7
    %v1974 = vrot.slane %v1848, 6
    %v1975 = vrot.slane %v1849, 5
    %v1976 = vrot.slane %v1850, 4
    %v1977 = vrot.slane %v1851, 3
    %v1978 = vrot.slane %v1852, 2
    %v1979 = vrot.slane %v1853, 1
    %v1980 = vrot.slane %v1855, 7
    %v1981 = vrot.slane %v1856, 6
    %v1982 = vrot.slane %v1857, 5
    %v1983 = vrot.slane %v1858, 4
    %v1984 = vrot.slane %v1859, 3
    %v1985 = vrot.slane %v1860, 2
    %v1986 = vrot.slane %v1861, 1
    %v1987 = vrot.slane %v1863, 7
    %v1988 = vrot.slane %v1864, 6
    %v1989 = vrot.slane %v1865, 5
    %v1990 = vrot.slane %v1866, 4
    %v1991 = vrot.slane %v1867, 3
    %v1992 = vrot.slane %v1868, 2
    %v1993 = vrot.slane %v1869, 1
    %v1994 = vrot.slane %v1871, 7
    %v1995 = vrot.slane %v1872, 6
    %v1996 = vrot.slane %v1873, 5
    %v1997 = vrot.slane %v1874, 4
    %v1998 = vrot.slane %v1875, 3
    %v1999 = vrot.slane %v1876, 2
    %v2000 = vrot.slane %v1877, 1
    %v2001 = vrot.slane %v1879, 7
    %v2002 = vrot.slane %v1880, 6
    %v2003 = vrot.slane %v1881, 5
    %v2004 = vrot.slane %v1882, 4
    %v2005 = vrot.slane %v1883, 3
    %v2006 = vrot.slane %v1884, 2
    %v2007 = vrot.slane %v1885, 1
    %v2008 = vrot.slane %v1887, 7
    %v2009 = vrot.slane %v1888, 6
    %v2010 = vrot.slane %v1889, 5
    %v2011 = vrot.slane %v1890, 4
    %v2012 = vrot.slane %v1891, 3
    %v2013 = vrot.slane %v1892, 2
    %v2014 = vrot.slane %v1893, 1
    %v2015 = vrot.slane %v1895, 7
    %v2016 = vrot.slane %v1896, 6
    %v2017 = vrot.slane %v1897, 5
    %v2018 = vrot.slane %v1898, 4
    %v2019 = vrot.slane %v1899, 3
    %v2020 = vrot.slane %v1900, 2
    %v2021 = vrot.slane %v1901, 1
    %vm2022 = vcmask 1040384
    %v2023 = vsel %vm2022, %v1838, %v1966
    %vm2024 = vcmask 1042434
    %v2025 = vsel %vm2024, %v1967, %v1968
    %vm2026 = vcmask 1041408
    %v2027 = vsel %vm2026, %v2023, %v2025
    %vm2028 = vcmask 1044484
    %v2029 = vsel %vm2028, %v1969, %v1970
    %vm2030 = vcmask 1046534
    %v2031 = vsel %vm2030, %v1971, %v1972
    %vm2032 = vcmask 1045508
    %v2033 = vsel %vm2032, %v2029, %v2031
    %v2034 = vsel %vm813, %v2027, %v2033
    %v2035 = vsel %vm2022, %v1846, %v1973
    %v2036 = vsel %vm2024, %v1974, %v1975
    %v2037 = vsel %vm2026, %v2035, %v2036
    %v2038 = vsel %vm2028, %v1976, %v1977
    %v2039 = vsel %vm2030, %v1978, %v1979
    %v2040 = vsel %vm2032, %v2038, %v2039
    %v2041 = vsel %vm813, %v2037, %v2040
    %v2042 = vsel %vm2022, %v1854, %v1980
    %v2043 = vsel %vm2024, %v1981, %v1982
    %v2044 = vsel %vm2026, %v2042, %v2043
    %v2045 = vsel %vm2028, %v1983, %v1984
    %v2046 = vsel %vm2030, %v1985, %v1986
    %v2047 = vsel %vm2032, %v2045, %v2046
    %v2048 = vsel %vm813, %v2044, %v2047
    %v2049 = vsel %vm2022, %v1862, %v1987
    %v2050 = vsel %vm2024, %v1988, %v1989
    %v2051 = vsel %vm2026, %v2049, %v2050
    %v2052 = vsel %vm2028, %v1990, %v1991
    %v2053 = vsel %vm2030, %v1992, %v1993
    %v2054 = vsel %vm2032, %v2052, %v2053
    %v2055 = vsel %vm813, %v2051, %v2054
    %v2056 = vsel %vm2022, %v1870, %v1994
    %v2057 = vsel %vm2024, %v1995, %v1996
    %v2058 = vsel %vm2026, %v2056, %v2057
    %v2059 = vsel %vm2028, %v1997, %v1998
    %v2060 = vsel %vm2030, %v1999, %v2000
    %v2061 = vsel %vm2032, %v2059, %v2060
    %v2062 = vsel %vm813, %v2058, %v2061
    %v2063 = vsel %vm2022, %v1878, %v2001
    %v2064 = vsel %vm2024, %v2002, %v2003
    %v2065 = vsel %vm2026, %v2063, %v2064
    %v2066 = vsel %vm2028, %v2004, %v2005
    %v2067 = vsel %vm2030, %v2006, %v2007
    %v2068 = vsel %vm2032, %v2066, %v2067
    %v2069 = vsel %vm813, %v2065, %v2068
    %v2070 = vsel %vm2022, %v1886, %v2008
    %v2071 = vsel %vm2024, %v2009, %v2010
    %v2072 = vsel %vm2026, %v2070, %v2071
    %v2073 = vsel %vm2028, %v2011, %v2012
    %v2074 = vsel %vm2030, %v2013, %v2014
    %v2075 = vsel %vm2032, %v2073, %v2074
    %v2076 = vsel %vm813, %v2072, %v2075
    %v2077 = vsel %vm2022, %v1894, %v2015
    %v2078 = vsel %vm2024, %v2016, %v2017
    %v2079 = vsel %vm2026, %v2077, %v2078
    %v2080 = vsel %vm2028, %v2018, %v2019
    %v2081 = vsel %vm2030, %v2020, %v2021
    %v2082 = vsel %vm2032, %v2080, %v2081
    %v2083 = vsel %vm813, %v2079, %v2082
    %vm2084 = vcmask 1041409
    %v2085 = vsel %vm2084, %v1838, %v1966
    %vm2086 = vcmask 1043459
    %v2087 = vsel %vm2086, %v1967, %v1968
    %vm2088 = vcmask 1042433
    %v2089 = vsel %vm2088, %v2085, %v2087
    %vm2090 = vcmask 1045509
    %v2091 = vsel %vm2090, %v1969, %v1970
    %vm2092 = vcmask 1046528
    %v2093 = vsel %vm2092, %v1972, %v1971
    %vm2094 = vcmask 1046533
    %v2095 = vsel %vm2094, %v2091, %v2093
    %vm2096 = vcmask 1044481
    %v2097 = vsel %vm2096, %v2089, %v2095
    %v2098 = vrot.slane %v2097, 1
    %v2099 = vsel %vm2084, %v1846, %v1973
    %v2100 = vsel %vm2086, %v1974, %v1975
    %v2101 = vsel %vm2088, %v2099, %v2100
    %v2102 = vsel %vm2090, %v1976, %v1977
    %v2103 = vsel %vm2092, %v1979, %v1978
    %v2104 = vsel %vm2094, %v2102, %v2103
    %v2105 = vsel %vm2096, %v2101, %v2104
    %v2106 = vrot.slane %v2105, 1
    %v2107 = vsel %vm2084, %v1854, %v1980
    %v2108 = vsel %vm2086, %v1981, %v1982
    %v2109 = vsel %vm2088, %v2107, %v2108
    %v2110 = vsel %vm2090, %v1983, %v1984
    %v2111 = vsel %vm2092, %v1986, %v1985
    %v2112 = vsel %vm2094, %v2110, %v2111
    %v2113 = vsel %vm2096, %v2109, %v2112
    %v2114 = vrot.slane %v2113, 1
    %v2115 = vsel %vm2084, %v1862, %v1987
    %v2116 = vsel %vm2086, %v1988, %v1989
    %v2117 = vsel %vm2088, %v2115, %v2116
    %v2118 = vsel %vm2090, %v1990, %v1991
    %v2119 = vsel %vm2092, %v1993, %v1992
    %v2120 = vsel %vm2094, %v2118, %v2119
    %v2121 = vsel %vm2096, %v2117, %v2120
    %v2122 = vrot.slane %v2121, 1
    %v2123 = vsel %vm2084, %v1870, %v1994
    %v2124 = vsel %vm2086, %v1995, %v1996
    %v2125 = vsel %vm2088, %v2123, %v2124
    %v2126 = vsel %vm2090, %v1997, %v1998
    %v2127 = vsel %vm2092, %v2000, %v1999
    %v2128 = vsel %vm2094, %v2126, %v2127
    %v2129 = vsel %vm2096, %v2125, %v2128
    %v2130 = vrot.slane %v2129, 1
    %v2131 = vsel %vm2084, %v1878, %v2001
    %v2132 = vsel %vm2086, %v2002, %v2003
    %v2133 = vsel %vm2088, %v2131, %v2132
    %v2134 = vsel %vm2090, %v2004, %v2005
    %v2135 = vsel %vm2092, %v2007, %v2006
    %v2136 = vsel %vm2094, %v2134, %v2135
    %v2137 = vsel %vm2096, %v2133, %v2136
    %v2138 = vrot.slane %v2137, 1
    %v2139 = vsel %vm2084, %v1886, %v2008
    %v2140 = vsel %vm2086, %v2009, %v2010
    %v2141 = vsel %vm2088, %v2139, %v2140
    %v2142 = vsel %vm2090, %v2011, %v2012
    %v2143 = vsel %vm2092, %v2014, %v2013
    %v2144 = vsel %vm2094, %v2142, %v2143
    %v2145 = vsel %vm2096, %v2141, %v2144
    %v2146 = vrot.slane %v2145, 1
    %v2147 = vsel %vm2084, %v1894, %v2015
    %v2148 = vsel %vm2086, %v2016, %v2017
    %v2149 = vsel %vm2088, %v2147, %v2148
    %v2150 = vsel %vm2090, %v2018, %v2019
    %v2151 = vsel %vm2092, %v2021, %v2020
    %v2152 = vsel %vm2094, %v2150, %v2151
    %v2153 = vsel %vm2096, %v2149, %v2152
    %v2154 = vrot.slane %v2153, 1
    %v2171 = vpack.c.bf16 %v2041, %v2034
    %v2172 = vpack.c.bf16 %v2055, %v2048
    %v2173 = vpack.c.bf16 %v2069, %v2062
    %v2174 = vpack.c.bf16 %v2083, %v2076
    %v2175 = vpack.c.bf16 %v2106, %v2098
    %v2176 = vpack.c.bf16 %v2122, %v2114
    %v2177 = vpack.c.bf16 %v2138, %v2130
    %v2178 = vpack.c.bf16 %v2154, %v2146
    %v2180 = vperm.slane %v191, 0
    %v2198 = vunpack.c.l.b16 %v175
    %v2199 = vunpack.c.l.b16 %v176
    %v2200 = vunpack.c.l.b16 %v177
    %v2201 = vunpack.c.l.b16 %v178
    %v2202 = vunpack.c.l.b16 %v179
    %v2203 = vunpack.c.l.b16 %v180
    %v2204 = vunpack.c.l.b16 %v181
    %v2205 = vunpack.c.l.b16 %v182
    %v2206 = vunpack.c.l.b16 %v183
    %v2207 = vunpack.c.l.b16 %v184
    %v2208 = vunpack.c.l.b16 %v185
    %v2209 = vunpack.c.l.b16 %v186
    %v2210 = vunpack.c.l.b16 %v187
    %v2211 = vunpack.c.l.b16 %v188
    %v2212 = vunpack.c.l.b16 %v189
    %v2213 = vunpack.c.l.b16 %v190
    %v2214 = vpack.c.b16 %v2199, %v2198
    %v2215 = vpack.c.b16 %v2201, %v2200
    %v2216 = vpack.c.b16 %v2203, %v2202
    %v2217 = vpack.c.b16 %v2205, %v2204
    %v2218 = vpack.c.b16 %v2207, %v2206
    %v2219 = vpack.c.b16 %v2209, %v2208
    %v2220 = vpack.c.b16 %v2211, %v2210
    %v2221 = vpack.c.b16 %v2213, %v2212
    %2230 = vmatpush.bf16.msra.mxu0 %v2221
    %2231 = vmatpush.bf16.msra.mxu0 %v2220
    %2232 = vmatpush.bf16.msra.mxu0 %v2219
    %2233 = vmatpush.bf16.msra.mxu0 %v2218
    %2234 = vmatpush.bf16.msra.mxu0 %v2217
    %2235 = vmatpush.bf16.msra.mxu0 %v2216
    %2236 = vmatpush.bf16.msra.mxu0 %v2215
    %2237 = vmatpush.bf16.msra.mxu0 %v2214
    %2238 = vmatmul.bf16.gmra.mxu0 %v2171
    %v2239 = vpop.f32.mrf.mxu0
    %v2240 = vadd.f32 %v2180, %v2239
    %v2241 = vpop.f32.mrf.mxu0
    %v2242 = vadd.f32 %v2180, %v2241
    %2243 = vmatmul.bf16.gmra.mxu0 %v2172
    %v2244 = vpop.f32.mrf.mxu0
    %v2245 = vadd.f32 %v2180, %v2244
    %v2246 = vpop.f32.mrf.mxu0
    %v2247 = vadd.f32 %v2180, %v2246
    %2248 = vmatmul.bf16.gmra.mxu0 %v2173
    %v2249 = vpop.f32.mrf.mxu0
    %v2250 = vadd.f32 %v2180, %v2249
    %v2251 = vpop.f32.mrf.mxu0
    %v2252 = vadd.f32 %v2180, %v2251
    %2253 = vmatmul.bf16.gmra.mxu0 %v2174
    %v2254 = vpop.f32.mrf.mxu0
    %v2255 = vadd.f32 %v2180, %v2254
    %v2256 = vpop.f32.mrf.mxu0
    %v2257 = vadd.f32 %v2180, %v2256
    %2258 = vmatmul.bf16.gmra.mxu0 %v2175
    %v2259 = vpop.f32.mrf.mxu0
    %v2260 = vadd.f32 %v2180, %v2259
    %v2261 = vpop.f32.mrf.mxu0
    %v2262 = vadd.f32 %v2180, %v2261
    %2263 = vmatmul.bf16.gmra.mxu0 %v2176
    %v2264 = vpop.f32.mrf.mxu0
    %v2265 = vadd.f32 %v2180, %v2264
    %v2266 = vpop.f32.mrf.mxu0
    %v2267 = vadd.f32 %v2180, %v2266
    %2268 = vmatmul.bf16.gmra.mxu0 %v2177
    %v2269 = vpop.f32.mrf.mxu0
    %v2270 = vadd.f32 %v2180, %v2269
    %v2271 = vpop.f32.mrf.mxu0
    %v2272 = vadd.f32 %v2180, %v2271
    %2273 = vmatmul.bf16.gmra.mxu0 %v2178
    %v2274 = vpop.f32.mrf.mxu0
    %v2275 = vadd.f32 %v2180, %v2274
    %v2276 = vpop.f32.mrf.mxu0
    %v2277 = vadd.f32 %v2180, %v2276
    %2278 = vdwg.mxu0
    %v2279 = vtanh.pop %v2240
    %v2280 = vtanh.pop %v2242
    %v2281 = vtanh.pop %v2245
    %v2282 = vtanh.pop %v2247
    %v2283 = vtanh.pop %v2250
    %v2284 = vtanh.pop %v2252
    %v2285 = vtanh.pop %v2255
    %v2286 = vtanh.pop %v2257
    %v2287 = vtanh.pop %v2260
    %v2288 = vtanh.pop %v2262
    %v2289 = vtanh.pop %v2265
    %v2290 = vtanh.pop %v2267
    %v2291 = vtanh.pop %v2270
    %v2292 = vtanh.pop %v2272
    %v2293 = vtanh.pop %v2275
    %v2294 = vtanh.pop %v2277
    %2296 = vset.pattern.permute.xlu0 0
    %2297 = vperm.xlu0 %2296, %v2279
    %v2298 = vpop.permute.xlu0 %2297
    %2301 = vset.pattern.permute.xlu0 0
    %2302 = vperm.xlu0 %2301, %v2280
    %v2303 = vpop.permute.xlu0 %2302
    %2306 = vset.pattern.permute.xlu0 0
    %2307 = vperm.xlu0 %2306, %v2281
    %v2308 = vpop.permute.xlu0 %2307
    %2311 = vset.pattern.permute.xlu0 0
    %2312 = vperm.xlu0 %2311, %v2282
    %v2313 = vpop.permute.xlu0 %2312
    %2316 = vset.pattern.permute.xlu0 0
    %2317 = vperm.xlu0 %2316, %v2283
    %v2318 = vpop.permute.xlu0 %2317
    %2321 = vset.pattern.permute.xlu0 0
    %2322 = vperm.xlu0 %2321, %v2284
    %v2323 = vpop.permute.xlu0 %2322
    %2326 = vset.pattern.permute.xlu0 0
    %2327 = vperm.xlu0 %2326, %v2285
    %v2328 = vpop.permute.xlu0 %2327
    %2331 = vset.pattern.permute.xlu0 0
    %2332 = vperm.xlu0 %2331, %v2286
    %v2333 = vpop.permute.xlu0 %2332
    %2336 = vset.pattern.permute.xlu0 0
    %2337 = vperm.xlu0 %2336, %v2287
    %v2338 = vpop.permute.xlu0 %2337
    %2341 = vset.pattern.permute.xlu0 0
    %2342 = vperm.xlu0 %2341, %v2288
    %v2343 = vpop.permute.xlu0 %2342
    %2346 = vset.pattern.permute.xlu0 0
    %2347 = vperm.xlu0 %2346, %v2289
    %v2348 = vpop.permute.xlu0 %2347
    %2351 = vset.pattern.permute.xlu0 0
    %2352 = vperm.xlu0 %2351, %v2290
    %v2353 = vpop.permute.xlu0 %2352
    %2356 = vset.pattern.permute.xlu0 0
    %2357 = vperm.xlu0 %2356, %v2291
    %v2358 = vpop.permute.xlu0 %2357
    %2361 = vset.pattern.permute.xlu0 0
    %2362 = vperm.xlu0 %2361, %v2292
    %v2363 = vpop.permute.xlu0 %2362
    %2366 = vset.pattern.permute.xlu0 0
    %2367 = vperm.xlu0 %2366, %v2293
    %v2368 = vpop.permute.xlu0 %2367
    %2371 = vset.pattern.permute.xlu0 0
    %2372 = vperm.xlu0 %2371, %v2294
    %v2373 = vpop.permute.xlu0 %2372
    %v2375 = vperm.slane %v68, 0
    %v2376 = vmul.f32 %v2298, %v2375
    %v2377 = vmul.f32 %v2303, %v2375
    %v2378 = vmul.f32 %v2308, %v2375
    %v2379 = vmul.f32 %v2313, %v2375
    %v2380 = vmul.f32 %v2318, %v2375
    %v2381 = vmul.f32 %v2323, %v2375
    %v2382 = vmul.f32 %v2328, %v2375
    %v2383 = vmul.f32 %v2333, %v2375
    %v2384 = vmul.f32 %v2338, %v2375
    %v2385 = vmul.f32 %v2343, %v2375
    %v2386 = vmul.f32 %v2348, %v2375
    %v2387 = vmul.f32 %v2353, %v2375
    %v2388 = vmul.f32 %v2358, %v2375
    %v2389 = vmul.f32 %v2363, %v2375
    %v2390 = vmul.f32 %v2368, %v2375
    %v2391 = vmul.f32 %v2373, %v2375
    %2392 = vset.pattern.permute.xlu0 1
    %2393 = vperm.xlu0 %2392, %v2279
    %v2394 = vpop.permute.xlu0 %2393
    %2396 = vset.pattern.permute.xlu0 1
    %2397 = vperm.xlu0 %2396, %v2280
    %v2398 = vpop.permute.xlu0 %2397
    %2400 = vset.pattern.permute.xlu0 1
    %2401 = vperm.xlu0 %2400, %v2281
    %v2402 = vpop.permute.xlu0 %2401
    %2404 = vset.pattern.permute.xlu0 1
    %2405 = vperm.xlu0 %2404, %v2282
    %v2406 = vpop.permute.xlu0 %2405
    %2408 = vset.pattern.permute.xlu0 1
    %2409 = vperm.xlu0 %2408, %v2283
    %v2410 = vpop.permute.xlu0 %2409
    %2412 = vset.pattern.permute.xlu0 1
    %2413 = vperm.xlu0 %2412, %v2284
    %v2414 = vpop.permute.xlu0 %2413
    %2416 = vset.pattern.permute.xlu0 1
    %2417 = vperm.xlu0 %2416, %v2285
    %v2418 = vpop.permute.xlu0 %2417
    %2420 = vset.pattern.permute.xlu0 1
    %2421 = vperm.xlu0 %2420, %v2286
    %v2422 = vpop.permute.xlu0 %2421
    %2424 = vset.pattern.permute.xlu0 1
    %2425 = vperm.xlu0 %2424, %v2287
    %v2426 = vpop.permute.xlu0 %2425
    %2428 = vset.pattern.permute.xlu0 1
    %2429 = vperm.xlu0 %2428, %v2288
    %v2430 = vpop.permute.xlu0 %2429
    %2432 = vset.pattern.permute.xlu0 1
    %2433 = vperm.xlu0 %2432, %v2289
    %v2434 = vpop.permute.xlu0 %2433
    %2436 = vset.pattern.permute.xlu0 1
    %2437 = vperm.xlu0 %2436, %v2290
    %v2438 = vpop.permute.xlu0 %2437
    %2440 = vset.pattern.permute.xlu0 1
    %2441 = vperm.xlu0 %2440, %v2291
    %v2442 = vpop.permute.xlu0 %2441
    %2444 = vset.pattern.permute.xlu0 1
    %2445 = vperm.xlu0 %2444, %v2292
    %v2446 = vpop.permute.xlu0 %2445
    %2448 = vset.pattern.permute.xlu0 1
    %2449 = vperm.xlu0 %2448, %v2293
    %v2450 = vpop.permute.xlu0 %2449
    %2452 = vset.pattern.permute.xlu0 1
    %2453 = vperm.xlu0 %2452, %v2294
    %v2454 = vpop.permute.xlu0 %2453
    %v2456 = vperm.slane %v68, 1
    %v2457 = vmul.f32 %v2394, %v2456
    %v2458 = vmul.f32 %v2398, %v2456
    %v2459 = vmul.f32 %v2402, %v2456
    %v2460 = vmul.f32 %v2406, %v2456
    %v2461 = vmul.f32 %v2410, %v2456
    %v2462 = vmul.f32 %v2414, %v2456
    %v2463 = vmul.f32 %v2418, %v2456
    %v2464 = vmul.f32 %v2422, %v2456
    %v2465 = vmul.f32 %v2426, %v2456
    %v2466 = vmul.f32 %v2430, %v2456
    %v2467 = vmul.f32 %v2434, %v2456
    %v2468 = vmul.f32 %v2438, %v2456
    %v2469 = vmul.f32 %v2442, %v2456
    %v2470 = vmul.f32 %v2446, %v2456
    %v2471 = vmul.f32 %v2450, %v2456
    %v2472 = vmul.f32 %v2454, %v2456
    %v2473 = vadd.f32 %v2376, %v2457
    %v2474 = vadd.f32 %v2377, %v2458
    %v2475 = vadd.f32 %v2378, %v2459
    %v2476 = vadd.f32 %v2379, %v2460
    %v2477 = vadd.f32 %v2380, %v2461
    %v2478 = vadd.f32 %v2381, %v2462
    %v2479 = vadd.f32 %v2382, %v2463
    %v2480 = vadd.f32 %v2383, %v2464
    %v2481 = vadd.f32 %v2384, %v2465
    %v2482 = vadd.f32 %v2385, %v2466
    %v2483 = vadd.f32 %v2386, %v2467
    %v2484 = vadd.f32 %v2387, %v2468
    %v2485 = vadd.f32 %v2388, %v2469
    %v2486 = vadd.f32 %v2389, %v2470
    %v2487 = vadd.f32 %v2390, %v2471
    %v2488 = vadd.f32 %v2391, %v2472
    %2489 = vset.pattern.permute.xlu0 2
    %2490 = vperm.xlu0 %2489, %v2279
    %v2491 = vpop.permute.xlu0 %2490
    %2493 = vset.pattern.permute.xlu0 2
    %2494 = vperm.xlu0 %2493, %v2280
    %v2495 = vpop.permute.xlu0 %2494
    %2497 = vset.pattern.permute.xlu0 2
    %2498 = vperm.xlu0 %2497, %v2281
    %v2499 = vpop.permute.xlu0 %2498
    %2501 = vset.pattern.permute.xlu0 2
    %2502 = vperm.xlu0 %2501, %v2282
    %v2503 = vpop.permute.xlu0 %2502
    %2505 = vset.pattern.permute.xlu0 2
    %2506 = vperm.xlu0 %2505, %v2283
    %v2507 = vpop.permute.xlu0 %2506
    %2509 = vset.pattern.permute.xlu0 2
    %2510 = vperm.xlu0 %2509, %v2284
    %v2511 = vpop.permute.xlu0 %2510
    %2513 = vset.pattern.permute.xlu0 2
    %2514 = vperm.xlu0 %2513, %v2285
    %v2515 = vpop.permute.xlu0 %2514
    %2517 = vset.pattern.permute.xlu0 2
    %2518 = vperm.xlu0 %2517, %v2286
    %v2519 = vpop.permute.xlu0 %2518
    %2521 = vset.pattern.permute.xlu0 2
    %2522 = vperm.xlu0 %2521, %v2287
    %v2523 = vpop.permute.xlu0 %2522
    %2525 = vset.pattern.permute.xlu0 2
    %2526 = vperm.xlu0 %2525, %v2288
    %v2527 = vpop.permute.xlu0 %2526
    %2529 = vset.pattern.permute.xlu0 2
    %2530 = vperm.xlu0 %2529, %v2289
    %v2531 = vpop.permute.xlu0 %2530
    %2533 = vset.pattern.permute.xlu0 2
    %2534 = vperm.xlu0 %2533, %v2290
    %v2535 = vpop.permute.xlu0 %2534
    %2537 = vset.pattern.permute.xlu0 2
    %2538 = vperm.xlu0 %2537, %v2291
    %v2539 = vpop.permute.xlu0 %2538
    %2541 = vset.pattern.permute.xlu0 2
    %2542 = vperm.xlu0 %2541, %v2292
    %v2543 = vpop.permute.xlu0 %2542
    %2545 = vset.pattern.permute.xlu0 2
    %2546 = vperm.xlu0 %2545, %v2293
    %v2547 = vpop.permute.xlu0 %2546
    %2549 = vset.pattern.permute.xlu0 2
    %2550 = vperm.xlu0 %2549, %v2294
    %v2551 = vpop.permute.xlu0 %2550
    %v2553 = vperm.slane %v68, 2
    %v2554 = vmul.f32 %v2491, %v2553
    %v2555 = vmul.f32 %v2495, %v2553
    %v2556 = vmul.f32 %v2499, %v2553
    %v2557 = vmul.f32 %v2503, %v2553
    %v2558 = vmul.f32 %v2507, %v2553
    %v2559 = vmul.f32 %v2511, %v2553
    %v2560 = vmul.f32 %v2515, %v2553
    %v2561 = vmul.f32 %v2519, %v2553
    %v2562 = vmul.f32 %v2523, %v2553
    %v2563 = vmul.f32 %v2527, %v2553
    %v2564 = vmul.f32 %v2531, %v2553
    %v2565 = vmul.f32 %v2535, %v2553
    %v2566 = vmul.f32 %v2539, %v2553
    %v2567 = vmul.f32 %v2543, %v2553
    %v2568 = vmul.f32 %v2547, %v2553
    %v2569 = vmul.f32 %v2551, %v2553
    %v2570 = vadd.f32 %v2473, %v2554
    %v2571 = vadd.f32 %v2474, %v2555
    %v2572 = vadd.f32 %v2475, %v2556
    %v2573 = vadd.f32 %v2476, %v2557
    %v2574 = vadd.f32 %v2477, %v2558
    %v2575 = vadd.f32 %v2478, %v2559
    %v2576 = vadd.f32 %v2479, %v2560
    %v2577 = vadd.f32 %v2480, %v2561
    %v2578 = vadd.f32 %v2481, %v2562
    %v2579 = vadd.f32 %v2482, %v2563
    %v2580 = vadd.f32 %v2483, %v2564
    %v2581 = vadd.f32 %v2484, %v2565
    %v2582 = vadd.f32 %v2485, %v2566
    %v2583 = vadd.f32 %v2486, %v2567
    %v2584 = vadd.f32 %v2487, %v2568
    %v2585 = vadd.f32 %v2488, %v2569
    %v2587 = vperm.slane %v69, 0
    %v2589 = vadd.f32 %v2570, %v2587
    %v2590 = vadd.f32 %v2571, %v2587
    %v2591 = vadd.f32 %v2572, %v2587
    %v2592 = vadd.f32 %v2573, %v2587
    %v2593 = vadd.f32 %v2574, %v2587
    %v2594 = vadd.f32 %v2575, %v2587
    %v2595 = vadd.f32 %v2576, %v2587
    %v2596 = vadd.f32 %v2577, %v2587
    %v2597 = vadd.f32 %v2578, %v2587
    %v2598 = vadd.f32 %v2579, %v2587
    %v2599 = vadd.f32 %v2580, %v2587
    %v2600 = vadd.f32 %v2581, %v2587
    %v2601 = vadd.f32 %v2582, %v2587
    %v2602 = vadd.f32 %v2583, %v2587
    %v2603 = vadd.f32 %v2584, %v2587
    %v2604 = vadd.f32 %v2585, %v2587
    %v2605 = vmax.f32 %v2589, 0.0
    %v2606 = vmax.f32 %v2590, 0.0
    %v2607 = vmax.f32 %v2591, 0.0
    %v2608 = vmax.f32 %v2592, 0.0
    %v2609 = vmax.f32 %v2593, 0.0
    %v2610 = vmax.f32 %v2594, 0.0
    %v2611 = vmax.f32 %v2595, 0.0
    %v2612 = vmax.f32 %v2596, 0.0
    %v2613 = vmax.f32 %v2597, 0.0
    %v2614 = vmax.f32 %v2598, 0.0
    %v2615 = vmax.f32 %v2599, 0.0
    %v2616 = vmax.f32 %v2600, 0.0
    %v2617 = vmax.f32 %v2601, 0.0
    %v2618 = vmax.f32 %v2602, 0.0
    %v2619 = vmax.f32 %v2603, 0.0
    %v2620 = vmax.f32 %v2604, 0.0
    %v2621 = vld [vmem:[#allocation2] sm:$0x3]
    %v2622 = vadd.f32 %v2605, %v2606
    %v2623 = vadd.f32 %v2622, %v2607
    %v2624 = vadd.f32 %v2623, %v2608
    %v2625 = vadd.f32 %v2624, %v2609
    %v2626 = vadd.f32 %v2625, %v2610
    %v2627 = vadd.f32 %v2626, %v2611
    %v2628 = vadd.f32 %v2627, %v2612
    %v2629 = vrot.slane %v2628, 4
    %v2630 = vadd.f32 %v2628, %v2629
    %v2631 = vrot.slane %v2630, 2
    %v2632 = vadd.f32 %v2630, %v2631
    %v2633 = vrot.slane %v2632, 1
    %v2634 = vadd.f32 %v2632, %v2633
    %v2635 = vadd.f32 %v2613, %v2614
    %v2636 = vadd.f32 %v2635, %v2615
    %v2637 = vadd.f32 %v2636, %v2616
    %v2638 = vadd.f32 %v2637, %v2617
    %v2639 = vadd.f32 %v2638, %v2618
    %v2640 = vadd.f32 %v2639, %v2619
    %v2641 = vadd.f32 %v2640, %v2620
    %v2642 = vrot.slane %v2641, 4
    %v2643 = vadd.f32 %v2641, %v2642
    %v2644 = vrot.slane %v2643, 2
    %v2645 = vadd.f32 %v2643, %v2644
    %v2646 = vrot.slane %v2645, 1
    %v2647 = vadd.f32 %v2645, %v2646
    %v2650 = vsel %vm2084, %v2647, %v2634
    %v2652 = vadd.f32 %v2621, %v2650
    %2653 = vst [vmem:[#allocation2] sm:$0x3] %v2652
    %v2654 = vld [vmem:[%s1] sm:$0xff]
    %v2655 = vld [vmem:[%s1 + $0x8] sm:$0xff]
    %v2656 = vld [vmem:[%s1 + $0x10] sm:$0xff]
    %v2657 = vld [vmem:[%s1 + $0x18] sm:$0xff]
    %v2658 = vld [vmem:[%s1 + $0x20] sm:$0xff]
    %v2659 = vld [vmem:[%s1 + $0x28] sm:$0xff]
    %v2660 = vld [vmem:[%s1 + $0x30] sm:$0xff]
    %v2661 = vld [vmem:[%s1 + $0x38] sm:$0xff]
    %v2662 = vld [vmem:[%s1 + $0x40] sm:$0xff]
    %v2663 = vld [vmem:[%s1 + $0x48] sm:$0xff]
    %v2664 = vld [vmem:[%s1 + $0x50] sm:$0xff]
    %v2665 = vld [vmem:[%s1 + $0x58] sm:$0xff]
    %v2666 = vld [vmem:[%s1 + $0x60] sm:$0xff]
    %v2667 = vld [vmem:[%s1 + $0x68] sm:$0xff]
    %v2668 = vld [vmem:[%s1 + $0x70] sm:$0xff]
    %v2669 = vld [vmem:[%s1 + $0x78] sm:$0xff]
    %2671 = vset.pattern.permute.xlu0 0
    %2672 = vperm.xlu0 %2671, %v2654
    %v2673 = vpop.permute.xlu0 %2672
    %2676 = vset.pattern.permute.xlu0 0
    %2677 = vperm.xlu0 %2676, %v2655
    %v2678 = vpop.permute.xlu0 %2677
    %2681 = vset.pattern.permute.xlu0 0
    %2682 = vperm.xlu0 %2681, %v2656
    %v2683 = vpop.permute.xlu0 %2682
    %2686 = vset.pattern.permute.xlu0 0
    %2687 = vperm.xlu0 %2686, %v2657
    %v2688 = vpop.permute.xlu0 %2687
    %2691 = vset.pattern.permute.xlu0 0
    %2692 = vperm.xlu0 %2691, %v2658
    %v2693 = vpop.permute.xlu0 %2692
    %2696 = vset.pattern.permute.xlu0 0
    %2697 = vperm.xlu0 %2696, %v2659
    %v2698 = vpop.permute.xlu0 %2697
    %2701 = vset.pattern.permute.xlu0 0
    %2702 = vperm.xlu0 %2701, %v2660
    %v2703 = vpop.permute.xlu0 %2702
    %2706 = vset.pattern.permute.xlu0 0
    %2707 = vperm.xlu0 %2706, %v2661
    %v2708 = vpop.permute.xlu0 %2707
    %2711 = vset.pattern.permute.xlu0 0
    %2712 = vperm.xlu0 %2711, %v2662
    %v2713 = vpop.permute.xlu0 %2712
    %2716 = vset.pattern.permute.xlu0 0
    %2717 = vperm.xlu0 %2716, %v2663
    %v2718 = vpop.permute.xlu0 %2717
    %2721 = vset.pattern.permute.xlu0 0
    %2722 = vperm.xlu0 %2721, %v2664
    %v2723 = vpop.permute.xlu0 %2722
    %2726 = vset.pattern.permute.xlu0 0
    %2727 = vperm.xlu0 %2726, %v2665
    %v2728 = vpop.permute.xlu0 %2727
    %2731 = vset.pattern.permute.xlu0 0
    %2732 = vperm.xlu0 %2731, %v2666
    %v2733 = vpop.permute.xlu0 %2732
    %2736 = vset.pattern.permute.xlu0 0
    %2737 = vperm.xlu0 %2736, %v2667
    %v2738 = vpop.permute.xlu0 %2737
    %2741 = vset.pattern.permute.xlu0 0
    %2742 = vperm.xlu0 %2741, %v2668
    %v2743 = vpop.permute.xlu0 %2742
    %2746 = vset.pattern.permute.xlu0 0
    %2747 = vperm.xlu0 %2746, %v2669
    %v2748 = vpop.permute.xlu0 %2747
    %v2750 = vmul.f32 %v2673, %v2375
    %v2751 = vmul.f32 %v2678, %v2375
    %v2752 = vmul.f32 %v2683, %v2375
    %v2753 = vmul.f32 %v2688, %v2375
    %v2754 = vmul.f32 %v2693, %v2375
    %v2755 = vmul.f32 %v2698, %v2375
    %v2756 = vmul.f32 %v2703, %v2375
    %v2757 = vmul.f32 %v2708, %v2375
    %v2758 = vmul.f32 %v2713, %v2375
    %v2759 = vmul.f32 %v2718, %v2375
    %v2760 = vmul.f32 %v2723, %v2375
    %v2761 = vmul.f32 %v2728, %v2375
    %v2762 = vmul.f32 %v2733, %v2375
    %v2763 = vmul.f32 %v2738, %v2375
    %v2764 = vmul.f32 %v2743, %v2375
    %v2765 = vmul.f32 %v2748, %v2375
    %2766 = vset.pattern.permute.xlu0 1
    %2767 = vperm.xlu0 %2766, %v2654
    %v2768 = vpop.permute.xlu0 %2767
    %2770 = vset.pattern.permute.xlu0 1
    %2771 = vperm.xlu0 %2770, %v2655
    %v2772 = vpop.permute.xlu0 %2771
    %2774 = vset.pattern.permute.xlu0 1
    %2775 = vperm.xlu0 %2774, %v2656
    %v2776 = vpop.permute.xlu0 %2775
    %2778 = vset.pattern.permute.xlu0 1
    %2779 = vperm.xlu0 %2778, %v2657
    %v2780 = vpop.permute.xlu0 %2779
    %2782 = vset.pattern.permute.xlu0 1
    %2783 = vperm.xlu0 %2782, %v2658
    %v2784 = vpop.permute.xlu0 %2783
    %2786 = vset.pattern.permute.xlu0 1
    %2787 = vperm.xlu0 %2786, %v2659
    %v2788 = vpop.permute.xlu0 %2787
    %2790 = vset.pattern.permute.xlu0 1
    %2791 = vperm.xlu0 %2790, %v2660
    %v2792 = vpop.permute.xlu0 %2791
    %2794 = vset.pattern.permute.xlu0 1
    %2795 = vperm.xlu0 %2794, %v2661
    %v2796 = vpop.permute.xlu0 %2795
    %2798 = vset.pattern.permute.xlu0 1
    %2799 = vperm.xlu0 %2798, %v2662
    %v2800 = vpop.permute.xlu0 %2799
    %2802 = vset.pattern.permute.xlu0 1
    %2803 = vperm.xlu0 %2802, %v2663
    %v2804 = vpop.permute.xlu0 %2803
    %2806 = vset.pattern.permute.xlu0 1
    %2807 = vperm.xlu0 %2806, %v2664
    %v2808 = vpop.permute.xlu0 %2807
    %2810 = vset.pattern.permute.xlu0 1
    %2811 = vperm.xlu0 %2810, %v2665
    %v2812 = vpop.permute.xlu0 %2811
    %2814 = vset.pattern.permute.xlu0 1
    %2815 = vperm.xlu0 %2814, %v2666
    %v2816 = vpop.permute.xlu0 %2815
    %2818 = vset.pattern.permute.xlu0 1
    %2819 = vperm.xlu0 %2818, %v2667
    %v2820 = vpop.permute.xlu0 %2819
    %2822 = vset.pattern.permute.xlu0 1
    %2823 = vperm.xlu0 %2822, %v2668
    %v2824 = vpop.permute.xlu0 %2823
    %2826 = vset.pattern.permute.xlu0 1
    %2827 = vperm.xlu0 %2826, %v2669
    %v2828 = vpop.permute.xlu0 %2827
    %v2830 = vmul.f32 %v2768, %v2456
    %v2831 = vmul.f32 %v2772, %v2456
    %v2832 = vmul.f32 %v2776, %v2456
    %v2833 = vmul.f32 %v2780, %v2456
    %v2834 = vmul.f32 %v2784, %v2456
    %v2835 = vmul.f32 %v2788, %v2456
    %v2836 = vmul.f32 %v2792, %v2456
    %v2837 = vmul.f32 %v2796, %v2456
    %v2838 = vmul.f32 %v2800, %v2456
    %v2839 = vmul.f32 %v2804, %v2456
    %v2840 = vmul.f32 %v2808, %v2456
    %v2841 = vmul.f32 %v2812, %v2456
    %v2842 = vmul.f32 %v2816, %v2456
    %v2843 = vmul.f32 %v2820, %v2456
    %v2844 = vmul.f32 %v2824, %v2456
    %v2845 = vmul.f32 %v2828, %v2456
    %v2846 = vadd.f32 %v2750, %v2830
    %v2847 = vadd.f32 %v2751, %v2831
    %v2848 = vadd.f32 %v2752, %v2832
    %v2849 = vadd.f32 %v2753, %v2833
    %v2850 = vadd.f32 %v2754, %v2834
    %v2851 = vadd.f32 %v2755, %v2835
    %v2852 = vadd.f32 %v2756, %v2836
    %v2853 = vadd.f32 %v2757, %v2837
    %v2854 = vadd.f32 %v2758, %v2838
    %v2855 = vadd.f32 %v2759, %v2839
    %v2856 = vadd.f32 %v2760, %v2840
    %v2857 = vadd.f32 %v2761, %v2841
    %v2858 = vadd.f32 %v2762, %v2842
    %v2859 = vadd.f32 %v2763, %v2843
    %v2860 = vadd.f32 %v2764, %v2844
    %v2861 = vadd.f32 %v2765, %v2845
    %2862 = vset.pattern.permute.xlu0 2
    %2863 = vperm.xlu0 %2862, %v2654
    %v2864 = vpop.permute.xlu0 %2863
    %2866 = vset.pattern.permute.xlu0 2
    %2867 = vperm.xlu0 %2866, %v2655
    %v2868 = vpop.permute.xlu0 %2867
    %2870 = vset.pattern.permute.xlu0 2
    %2871 = vperm.xlu0 %2870, %v2656
    %v2872 = vpop.permute.xlu0 %2871
    %2874 = vset.pattern.permute.xlu0 2
    %2875 = vperm.xlu0 %2874, %v2657
    %v2876 = vpop.permute.xlu0 %2875
    %2878 = vset.pattern.permute.xlu0 2
    %2879 = vperm.xlu0 %2878, %v2658
    %v2880 = vpop.permute.xlu0 %2879
    %2882 = vset.pattern.permute.xlu0 2
    %2883 = vperm.xlu0 %2882, %v2659
    %v2884 = vpop.permute.xlu0 %2883
    %2886 = vset.pattern.permute.xlu0 2
    %2887 = vperm.xlu0 %2886, %v2660
    %v2888 = vpop.permute.xlu0 %2887
    %2890 = vset.pattern.permute.xlu0 2
    %2891 = vperm.xlu0 %2890, %v2661
    %v2892 = vpop.permute.xlu0 %2891
    %2894 = vset.pattern.permute.xlu0 2
    %2895 = vperm.xlu0 %2894, %v2662
    %v2896 = vpop.permute.xlu0 %2895
    %2898 = vset.pattern.permute.xlu0 2
    %2899 = vperm.xlu0 %2898, %v2663
    %v2900 = vpop.permute.xlu0 %2899
    %2902 = vset.pattern.permute.xlu0 2
    %2903 = vperm.xlu0 %2902, %v2664
    %v2904 = vpop.permute.xlu0 %2903
    %2906 = vset.pattern.permute.xlu0 2
    %2907 = vperm.xlu0 %2906, %v2665
    %v2908 = vpop.permute.xlu0 %2907
    %2910 = vset.pattern.permute.xlu0 2
    %2911 = vperm.xlu0 %2910, %v2666
    %v2912 = vpop.permute.xlu0 %2911
    %2914 = vset.pattern.permute.xlu0 2
    %2915 = vperm.xlu0 %2914, %v2667
    %v2916 = vpop.permute.xlu0 %2915
    %2918 = vset.pattern.permute.xlu0 2
    %2919 = vperm.xlu0 %2918, %v2668
    %v2920 = vpop.permute.xlu0 %2919
    %2922 = vset.pattern.permute.xlu0 2
    %2923 = vperm.xlu0 %2922, %v2669
    %v2924 = vpop.permute.xlu0 %2923
    %v2926 = vmul.f32 %v2864, %v2553
    %v2927 = vmul.f32 %v2868, %v2553
    %v2928 = vmul.f32 %v2872, %v2553
    %v2929 = vmul.f32 %v2876, %v2553
    %v2930 = vmul.f32 %v2880, %v2553
    %v2931 = vmul.f32 %v2884, %v2553
    %v2932 = vmul.f32 %v2888, %v2553
    %v2933 = vmul.f32 %v2892, %v2553
    %v2934 = vmul.f32 %v2896, %v2553
    %v2935 = vmul.f32 %v2900, %v2553
    %v2936 = vmul.f32 %v2904, %v2553
    %v2937 = vmul.f32 %v2908, %v2553
    %v2938 = vmul.f32 %v2912, %v2553
    %v2939 = vmul.f32 %v2916, %v2553
    %v2940 = vmul.f32 %v2920, %v2553
    %v2941 = vmul.f32 %v2924, %v2553
    %v2942 = vadd.f32 %v2846, %v2926
    %v2943 = vadd.f32 %v2847, %v2927
    %v2944 = vadd.f32 %v2848, %v2928
    %v2945 = vadd.f32 %v2849, %v2929
    %v2946 = vadd.f32 %v2850, %v2930
    %v2947 = vadd.f32 %v2851, %v2931
    %v2948 = vadd.f32 %v2852, %v2932
    %v2949 = vadd.f32 %v2853, %v2933
    %v2950 = vadd.f32 %v2854, %v2934
    %v2951 = vadd.f32 %v2855, %v2935
    %v2952 = vadd.f32 %v2856, %v2936
    %v2953 = vadd.f32 %v2857, %v2937
    %v2954 = vadd.f32 %v2858, %v2938
    %v2955 = vadd.f32 %v2859, %v2939
    %v2956 = vadd.f32 %v2860, %v2940
    %v2957 = vadd.f32 %v2861, %v2941
    %v2958 = vadd.f32 %v2942, %v2587
    %v2959 = vadd.f32 %v2943, %v2587
    %v2960 = vadd.f32 %v2944, %v2587
    %v2961 = vadd.f32 %v2945, %v2587
    %v2962 = vadd.f32 %v2946, %v2587
    %v2963 = vadd.f32 %v2947, %v2587
    %v2964 = vadd.f32 %v2948, %v2587
    %v2965 = vadd.f32 %v2949, %v2587
    %v2966 = vadd.f32 %v2950, %v2587
    %v2967 = vadd.f32 %v2951, %v2587
    %v2968 = vadd.f32 %v2952, %v2587
    %v2969 = vadd.f32 %v2953, %v2587
    %v2970 = vadd.f32 %v2954, %v2587
    %v2971 = vadd.f32 %v2955, %v2587
    %v2972 = vadd.f32 %v2956, %v2587
    %v2973 = vadd.f32 %v2957, %v2587
    %v2974 = vmax.f32 %v2958, 0.0
    %v2975 = vmax.f32 %v2959, 0.0
    %v2976 = vmax.f32 %v2960, 0.0
    %v2977 = vmax.f32 %v2961, 0.0
    %v2978 = vmax.f32 %v2962, 0.0
    %v2979 = vmax.f32 %v2963, 0.0
    %v2980 = vmax.f32 %v2964, 0.0
    %v2981 = vmax.f32 %v2965, 0.0
    %v2982 = vmax.f32 %v2966, 0.0
    %v2983 = vmax.f32 %v2967, 0.0
    %v2984 = vmax.f32 %v2968, 0.0
    %v2985 = vmax.f32 %v2969, 0.0
    %v2986 = vmax.f32 %v2970, 0.0
    %v2987 = vmax.f32 %v2971, 0.0
    %v2988 = vmax.f32 %v2972, 0.0
    %v2989 = vmax.f32 %v2973, 0.0
    %v2990 = vld [vmem:[#allocation3] sm:$0x3]
    %v2991 = vadd.f32 %v2974, %v2975
    %v2992 = vadd.f32 %v2991, %v2976
    %v2993 = vadd.f32 %v2992, %v2977
    %v2994 = vadd.f32 %v2993, %v2978
    %v2995 = vadd.f32 %v2994, %v2979
    %v2996 = vadd.f32 %v2995, %v2980
    %v2997 = vadd.f32 %v2996, %v2981
    %v2998 = vrot.slane %v2997, 4
    %v2999 = vadd.f32 %v2997, %v2998
    %v3000 = vrot.slane %v2999, 2
    %v3001 = vadd.f32 %v2999, %v3000
    %v3002 = vrot.slane %v3001, 1
    %v3003 = vadd.f32 %v3001, %v3002
    %v3004 = vadd.f32 %v2982, %v2983
    %v3005 = vadd.f32 %v3004, %v2984
    %v3006 = vadd.f32 %v3005, %v2985
    %v3007 = vadd.f32 %v3006, %v2986
    %v3008 = vadd.f32 %v3007, %v2987
    %v3009 = vadd.f32 %v3008, %v2988
    %v3010 = vadd.f32 %v3009, %v2989
    %v3011 = vrot.slane %v3010, 4
    %v3012 = vadd.f32 %v3010, %v3011
    %v3013 = vrot.slane %v3012, 2
    %v3014 = vadd.f32 %v3012, %v3013
    %v3015 = vrot.slane %v3014, 1
    %v3016 = vadd.f32 %v3014, %v3015
    %v3019 = vsel %vm2084, %v3016, %v3003
    %v3021 = vadd.f32 %v2990, %v3019
    %3022 = vst [vmem:[#allocation3] sm:$0x3] %v3021
    // Predicated region
    $region58: #{tpu_custom_call.1} parent=1 // pred_check
      %p3023 = pneg %p62
    $region59: #{tpu_custom_call.1} parent=1 // pred_check_branch
      %3025 = sbr.rel (%p3023) target = $region61
    $region60: #{tpu_custom_call.1} parent=1 // pred_region
      %v3026 = vld [vmem:[#allocation2] sm:$0x3]
      %v3027 = vld [vmem:[%s8] sm:$0x3]
      %v3028 = vld [vmem:[%s10] sm:$0x1]
      %v3029 = vld [vmem:[#allocation4] sm:$0x1]
      %v3031 = vperm.slane %v3028, 0
      %v3033 = vadd.f32 %v3031, %v3027
      %v3034 = vmul.f32 %v3026, %v3033
      %v3035 = vsel %vm2026, %v3034, 0.0
      %3036 = vadd.xlane.f32.xlu0 %v3035
      %v3037 = vpop.xlane.xlu0 %3036
      %v3039 = vperm.slane %v3029, 0
      %v3041 = vadd.f32 %v3037, %v3039
      %vm3042 = vcmask 1024
      %3043 = vst.msk [vmem:[%s12] sm:$0x3] %vm3042, %v3041
      %v3044 = vld [vmem:[#allocation3] sm:$0x3]
      %v3045 = vld [vmem:[%s9] sm:$0x3]
      %v3046 = vld [vmem:[%s10] sm:$0x1]
      %v3047 = vld [vmem:[#allocation4] sm:$0x1]
      %v3049 = vperm.slane %v3046, 0
      %v3051 = vadd.f32 %v3049, %v3045
      %v3052 = vmul.f32 %v3044, %v3051
      %v3053 = vsel %vm2026, %v3052, 0.0
      %3054 = vadd.xlane.f32.xlu0 %v3053
      %v3055 = vpop.xlane.xlu0 %3054
      %v3057 = vperm.slane %v3047, 0
      %v3059 = vadd.f32 %v3055, %v3057
      %3060 = vst.msk [vmem:[%s13] sm:$0x3] %vm3042, %v3059
    $region61: #{tpu_custom_call.1} parent=1 // pred_fallthru
      _
    // Predicated region
    $region62: #{tpu_custom_call.1} parent=1 // pred_check
      _
    $region63: #{tpu_custom_call.1} parent=1 // pred_check_branch
      %3062 = sbr.rel (0) target = $region65
    $region64: #{tpu_custom_call.1} parent=1 // pred_region
      _
    $region65: #{tpu_custom_call.1} parent=1 // pred_fallthru
      _
    // Predicated region
    $region66: #{tpu_custom_call.1} parent=1 // pred_check
      _
    $region67: #{tpu_custom_call.1} parent=1 // pred_check_branch
      %3064 = sbr.rel (0) target = $region69
    $region68: #{tpu_custom_call.1} parent=1 // pred_region
      _
    $region69: #{tpu_custom_call.1} parent=1 // pred_fallthru
      _
    // Predicated region
    $region70: #{tpu_custom_call.1} parent=1 // pred_check
      _
    $region71: #{tpu_custom_call.1} parent=1 // pred_check_branch
      %3066 = sbr.rel (0) target = $region73
    $region72: #{tpu_custom_call.1} parent=1 // pred_region
      _
    $region73: #{tpu_custom_call.1} parent=1 // pred_fallthru
      _
    // Predicated region
    $region74: #{tpu_custom_call.1} parent=1 // pred_check
      _
    $region75: #{tpu_custom_call.1} parent=1 // pred_check_branch
      %3068 = sbr.rel (0) target = $region77
    $region76: #{tpu_custom_call.1} parent=1 // pred_region
      _
    $region77: #{tpu_custom_call.1} parent=1 // pred_fallthru
      _
    %3069 = vsyncpa [#allocation6], 1

</llo_original>
